<compile_context>
chip_gen: v5e
topology: v5e:2x2
jax: 0.10.0
libtpu: 0.0.40
codegen_flags: <defaults>
</compile_context>

<pallas_src>
import functools

import jax
import jax.numpy as jnp
from jax.experimental import pallas as pl
from jax.experimental.pallas import tpu as pltpu

LN_EPS = 1e-5  # nn.LayerNorm default


def _gelu_exact(x):
    # PyTorch nn.GELU() default = exact erf-based GELU (do NOT use tanh approx).
    inv_sqrt2 = jnp.asarray(0.7071067811865476, dtype=x.dtype)
    return 0.5 * x * (1.0 + jax.lax.erf(x * inv_sqrt2))


def _layernorm(x, gamma, beta):
    mu = jnp.mean(x, axis=-1, keepdims=True)
    var = jnp.mean((x - mu) ** 2, axis=-1, keepdims=True)
    return (x - mu) * jax.lax.rsqrt(var + LN_EPS) * gamma + beta


def _head_math(audio_feat, vis_feat,
               aw, ab, vw, vb, fwa, fwv, fb, fg, fbe,
               c1w, c1b, c1g, c1be, c2w, c2b):
    """Projections + fusion + classifier.

    Matmuls run in the weights' dtype (bf16 on the MXU) with f32 accumulation;
    LayerNorm / GELU stay in f32. Shared by the kernel and the pure-JAX reference
    so the precision policy is identical.
    """
    a = jnp.dot(audio_feat.astype(aw.dtype), aw, preferred_element_type=jnp.float32) + ab
    v = jnp.dot(vis_feat.astype(vw.dtype), vw, preferred_element_type=jnp.float32) + vb
    # concat([a, v]) @ Wf  ==  a @ Wf[:D] + v @ Wf[D:]   (no lane-axis concatenate)
    h = (jnp.dot(a.astype(fwa.dtype), fwa, preferred_element_type=jnp.float32)
         + jnp.dot(v.astype(fwv.dtype), fwv, preferred_element_type=jnp.float32)
         + fb)
    h = _gelu_exact(_layernorm(h, fg, fbe))
    c = jnp.dot(h.astype(c1w.dtype), c1w, preferred_element_type=jnp.float32) + c1b
    c = _gelu_exact(_layernorm(c, c1g, c1be))
    logits = jnp.dot(c.astype(c2w.dtype), c2w, preferred_element_type=jnp.float32) + c2b
    return logits, h


def _avff_kernel(audio_ref,                   # (TB, TT, Da)  streamed, bf16
                 vis_ref,                     # (TB, F, Dv)   CLS tokens, resident over t
                 aw_ref, ab_ref, vw_ref, vb_ref,
                 fwa_ref, fwv_ref, fb_ref, fg_ref, fbe_ref,
                 c1w_ref, c1b_ref, c1g_ref, c1be_ref,
                 c2w_ref, c2b_ref,
                 logits_ref,                  # out: (TB, num_classes)
                 feat_ref,                    # out: (TB, fusion_dim)
                 acc_ref,                     # scratch: (TB, Da) f32 running audio sum
                 *, inv_ta, inv_f):
    t = pl.program_id(1)

    @pl.when(t == 0)
    def _():
        acc_ref[...] = jnp.zeros_like(acc_ref)

    # Pipelined partial mean over the audio time axis: the XLU sublane reduce runs
    # while the next audio tile is DMA'd in. f32 accumulation of bf16-streamed data.
    acc_ref[...] += jnp.sum(audio_ref[...].astype(jnp.float32), axis=1)

    @pl.when(t == pl.num_programs(1) - 1)
    def _():
        audio_feat = acc_ref[...] * inv_ta                                      # (TB, Da)
        vis_feat = jnp.sum(vis_ref[...].astype(jnp.float32), axis=1) * inv_f    # (TB, Dv)
        logits, h = _head_math(
            audio_feat, vis_feat,
            aw_ref[...], ab_ref[...], vw_ref[...], vb_ref[...],
            fwa_ref[...], fwv_ref[...], fb_ref[...], fg_ref[...], fbe_ref[...],
            c1w_ref[...], c1b_ref[...], c1g_ref[...], c1be_ref[...],
            c2w_ref[...], c2b_ref[...])
        feat_ref[...] = h.astype(feat_ref.dtype)
        logits_ref[...] = logits.astype(logits_ref.dtype)


def _choose_time_tile(ta, cap=512):
    """Largest multiple of 16 (bf16 sublane pack) dividing Ta, capped; else full Ta.
    cap=512 keeps an (8, 512, 768) bf16 block at ~6 MiB/buffer -> double-buffered it
    is still well under the 48 MiB scoped-VMEM limit (v7x physical VMEM = 64 MiB)."""
    best = None
    t = 16
    while t <= min(ta, cap):
        if ta % t == 0:
            best = t
        t += 16
    return best if best is not None else ta


def _choose_batch_tile(b):
    return 8 if (b >= 8 and b % 8 == 0) else b


def avff_forward(audio_hidden, visual_tokens, params, *, tb=None, tt=None,
                 stream_dtype=jnp.bfloat16):
    """audio_hidden: (B, Ta, Da) f32; visual_tokens: (B, F, S, Dv) f32."""
    B, Ta, Da = audio_hidden.shape
    _, F, _S, Dv = visual_tokens.shape
    (aw, ab, vw, vb, fw, fb, fg, fbe,
     c1w, c1b, c1g, c1be, c2w, c2b) = params
    D = fw.shape[1]
    C = c2w.shape[1]

    # TODO(synk): the CLS-token gather could be folded into the kernel via an S-axis
    # block of 1 at token 0, but a 1-wide block on the sublane axis (S not a multiple
    # of 8) is not layout-safe; keep it as a cheap XLA strided slice in the wrapper.
    vis_cls = visual_tokens[:, :, 0, :].astype(stream_dtype)       # (B, F, Dv)
    audio = audio_hidden.astype(stream_dtype)                      # (B, Ta, Da)

    # bf16 matmul weights (MXU-native on v6e/v7x, half the resident bytes).
    # Biases / LayerNorm params stay f32; all elementwise math stays f32.
    wdt = stream_dtype
    fwa, fwv = fw[:D].astype(wdt), fw[D:].astype(wdt)
    aw_c, vw_c = aw.astype(wdt), vw.astype(wdt)
    c1w_c, c2w_c = c1w.astype(wdt), c2w.astype(wdt)

    if tb is None:
        tb = _choose_batch_tile(B)
    if tt is None:
        tt = _choose_time_tile(Ta)
    assert B % tb == 0 and (tb % 8 == 0 or tb == B)
    assert Ta % tt == 0 and (tt % 8 == 0 or tt == Ta)
    nb, nt = B // tb, Ta // tt

    const2 = lambda b, t: (0, 0)   # weights: resident in VMEM across the whole grid
    in_specs = [
        pl.BlockSpec((tb, tt, Da), lambda b, t: (b, t, 0)),   # streamed audio tiles
        pl.BlockSpec((tb, F, Dv), lambda b, t: (b, 0, 0)),    # CLS tokens (resident over t)
    ] + [pl.BlockSpec(p.shape, const2) for p in
         (aw_c, ab, vw_c, vb, fwa, fwv, fb, fg, fbe,
          c1w_c, c1b, c1g, c1be, c2w_c, c2b)]

    out_shape = (jax.ShapeDtypeStruct((B, C), jnp.float32),
                 jax.ShapeDtypeStruct((B, D), jnp.float32))
    out_specs = (pl.BlockSpec((tb, C), lambda b, t: (b, 0)),
                 pl.BlockSpec((tb, D), lambda b, t: (b, 0)))

    kernel = functools.partial(_avff_kernel, inv_ta=1.0 / Ta, inv_f=1.0 / F)

    logits, feat = pl.pallas_call(
        kernel,
        out_shape=out_shape,
        grid=(nb, nt),
        in_specs=in_specs,
        out_specs=out_specs,
        scratch_shapes=[pltpu.VMEM((tb, Da), jnp.float32)],
        compiler_params=pltpu.CompilerParams(
            # batch tiles parallel (v7x: 2 TCs split them), Ta is the reduction axis
            dimension_semantics=("parallel", "arbitrary"),
            # sized for v7x's 64 MiB physical VMEM; tiles chosen to stay well under
            vmem_limit_bytes=48 * 1024 * 1024),
    )(audio, vis_cls,
      aw_c, ab, vw_c, vb, fwa, fwv, fb, fg, fbe,
      c1w_c, c1b, c1g, c1be, c2w_c, c2b)
    return {"logits": logits, "features": feat}


def _reference(audio_hidden, visual_tokens, params, *, stream_dtype=jnp.bfloat16):
    """Pure-JAX reference with the identical precision policy as the kernel."""
    (aw, ab, vw, vb, fw, fb, fg, fbe,
     c1w, c1b, c1g, c1be, c2w, c2b) = params
    D = fw.shape[1]
    a = audio_hidden.astype(stream_dtype).astype(jnp.float32)
    v = visual_tokens[:, :, 0, :].astype(stream_dtype).astype(jnp.float32)
    audio_feat = jnp.sum(a, axis=1) * (1.0 / a.shape[1])
    vis_feat = jnp.sum(v, axis=1) * (1.0 / v.shape[1])
    wdt = stream_dtype
    return _head_math(audio_feat, vis_feat,
                      aw.astype(wdt), ab, vw.astype(wdt), vb,
                      fw[:D].astype(wdt), fw[D:].astype(wdt), fb, fg, fbe,
                      c1w.astype(wdt), c1b, c1g, c1be,
                      c2w.astype(wdt), c2b)


def make_params(key, audio_dim, visual_dim, fusion_dim, num_classes):
    ks = jax.random.split(key, 6)
    s = 0.02
    D, H = fusion_dim, fusion_dim // 2
    aw = s * jax.random.normal(ks[0], (audio_dim, D), jnp.float32)
    ab = jnp.zeros((1, D), jnp.float32)
    vw = s * jax.random.normal(ks[1], (visual_dim, D), jnp.float32)
    vb = jnp.zeros((1, D), jnp.float32)
    fw = s * jax.random.normal(ks[2], (2 * D, D), jnp.float32)
    fb = jnp.zeros((1, D), jnp.float32)
    fg = jnp.ones((1, D), jnp.float32)
    fbe = jnp.zeros((1, D), jnp.float32)
    c1w = s * jax.random.normal(ks[3], (D, H), jnp.float32)
    c1b = jnp.zeros((1, H), jnp.float32)
    c1g = jnp.ones((1, H), jnp.float32)
    c1be = jnp.zeros((1, H), jnp.float32)
    c2w = s * jax.random.normal(ks[4], (H, num_classes), jnp.float32)
    c2b = jnp.zeros((1, num_classes), jnp.float32)
    return (aw, ab, vw, vb, fw, fb, fg, fbe, c1w, c1b, c1g, c1be, c2w, c2b)


if __name__ == "__main__":
    # Small, shape-consistent synthetic setup.
    B, F, S = 2, 4, 9            # batch, video frames, ViT tokens (CLS + 8 patches)
    Ta = 32                      # audio sequence length (wav2vec2 frames)
    Da, Dv = 32, 32              # encoder hidden sizes (real: 768)
    fusion_dim, num_classes = 32, 2

    key = jax.random.PRNGKey(0)
    k_a, k_v, k_p = jax.random.split(key, 3)
    audio_hidden = jax.random.normal(k_a, (B, Ta, Da), jnp.float32)
    visual_tokens = jax.random.normal(k_v, (B, F, S, Dv), jnp.float32)
    params = make_params(k_p, Da, Dv, fusion_dim, num_classes)

    # tt=16 -> 2 audio-time grid steps, exercising the accumulator/pipeline path.
    out = avff_forward(audio_hidden, visual_tokens, params, tt=16)
    jax.block_until_ready(out)

    ref_logits, ref_feat = _reference(audio_hidden, visual_tokens, params)
    assert out["logits"].shape == (B, num_classes)
    assert out["features"].shape == (B, fusion_dim)
    assert jnp.allclose(out["logits"], ref_logits, atol=2e-4, rtol=2e-4)
    assert jnp.allclose(out["features"], ref_feat, atol=2e-4, rtol=2e-4)
    print("KERNEL_OK")
</pallas_src>

<mosaic_0001>
module attributes {stable_mosaic.version = 11 : i64} {
  func.func @_avff_kernel(%arg0: i32, %arg1: i32, %arg2: memref<2x16x32xbf16, #tpu.memory_space<vmem>>, %arg3: memref<2x4x32xbf16, #tpu.memory_space<vmem>>, %arg4: memref<32x32xbf16, #tpu.memory_space<vmem>>, %arg5: memref<1x32xf32, #tpu.memory_space<vmem>>, %arg6: memref<32x32xbf16, #tpu.memory_space<vmem>>, %arg7: memref<1x32xf32, #tpu.memory_space<vmem>>, %arg8: memref<32x32xbf16, #tpu.memory_space<vmem>>, %arg9: memref<32x32xbf16, #tpu.memory_space<vmem>>, %arg10: memref<1x32xf32, #tpu.memory_space<vmem>>, %arg11: memref<1x32xf32, #tpu.memory_space<vmem>>, %arg12: memref<1x32xf32, #tpu.memory_space<vmem>>, %arg13: memref<32x16xbf16, #tpu.memory_space<vmem>>, %arg14: memref<1x16xf32, #tpu.memory_space<vmem>>, %arg15: memref<1x16xf32, #tpu.memory_space<vmem>>, %arg16: memref<1x16xf32, #tpu.memory_space<vmem>>, %arg17: memref<16x2xbf16, #tpu.memory_space<vmem>>, %arg18: memref<1x2xf32, #tpu.memory_space<vmem>>, %arg19: memref<2x2xf32, #tpu.memory_space<vmem>>, %arg20: memref<2x32xf32, #tpu.memory_space<vmem>>, %arg21: memref<2x32xf32, #tpu.memory_space<vmem>>) attributes {dimension_semantics = [#tpu.dimension_semantics<parallel>, #tpu.dimension_semantics<arbitrary>], iteration_bounds = array<i64: 1, 2>, scalar_prefetch = 0 : i64, scratch_operands = 1 : i64, tpu.core_type = #tpu.core_type<tc>, window_params = [{transform_indices = @transform_0, window_bounds = array<i64: 2, 16, 32>}, {transform_indices = @transform_1, window_bounds = array<i64: 2, 4, 32>}, {pipeline_mode = #tpu.pipeline_mode<synchronous>, transform_indices = @transform_2, window_bounds = array<i64: 32, 32>}, {pipeline_mode = #tpu.pipeline_mode<synchronous>, transform_indices = @transform_3, window_bounds = array<i64: 1, 32>}, {pipeline_mode = #tpu.pipeline_mode<synchronous>, transform_indices = @transform_4, window_bounds = array<i64: 32, 32>}, {pipeline_mode = #tpu.pipeline_mode<synchronous>, transform_indices = @transform_5, window_bounds = array<i64: 1, 32>}, {pipeline_mode = #tpu.pipeline_mode<synchronous>, transform_indices = @transform_6, window_bounds = array<i64: 32, 32>}, {pipeline_mode = #tpu.pipeline_mode<synchronous>, transform_indices = @transform_7, window_bounds = array<i64: 32, 32>}, {pipeline_mode = #tpu.pipeline_mode<synchronous>, transform_indices = @transform_8, window_bounds = array<i64: 1, 32>}, {pipeline_mode = #tpu.pipeline_mode<synchronous>, transform_indices = @transform_9, window_bounds = array<i64: 1, 32>}, {pipeline_mode = #tpu.pipeline_mode<synchronous>, transform_indices = @transform_10, window_bounds = array<i64: 1, 32>}, {pipeline_mode = #tpu.pipeline_mode<synchronous>, transform_indices = @transform_11, window_bounds = array<i64: 32, 16>}, {pipeline_mode = #tpu.pipeline_mode<synchronous>, transform_indices = @transform_12, window_bounds = array<i64: 1, 16>}, {pipeline_mode = #tpu.pipeline_mode<synchronous>, transform_indices = @transform_13, window_bounds = array<i64: 1, 16>}, {pipeline_mode = #tpu.pipeline_mode<synchronous>, transform_indices = @transform_14, window_bounds = array<i64: 1, 16>}, {pipeline_mode = #tpu.pipeline_mode<synchronous>, transform_indices = @transform_15, window_bounds = array<i64: 16, 2>}, {pipeline_mode = #tpu.pipeline_mode<synchronous>, transform_indices = @transform_16, window_bounds = array<i64: 1, 2>}, {transform_indices = @transform_17, window_bounds = array<i64: 2, 2>}, {transform_indices = @transform_18, window_bounds = array<i64: 2, 32>}]} {
    %c0_i32 = arith.constant 0 : i32
    %0 = arith.cmpi eq, %arg1, %c0_i32 : i32
    %1 = arith.extui %0 : i1 to i32
    %c0_i32_0 = arith.constant 0 : i32
    %2 = arith.cmpi ne, %1, %c0_i32_0 : i32
    scf.if %2 {
      %cst_8 = arith.constant 0.000000e+00 : f32
      %12 = vector.broadcast %cst_8 : f32 to vector<2x32xf32>
      %c0_9 = arith.constant 0 : index
      %c0_10 = arith.constant 0 : index
      %13 = vector.load %arg21[%c0_9, %c0_10] : memref<2x32xf32, #tpu.memory_space<vmem>>, vector<2x32xf32>
      tpu.vector_store %arg21[%c0_9, %c0_10], %12 {strides = array<i32>} : memref<2x32xf32, #tpu.memory_space<vmem>>, vector<2x32xf32>,
    } else {
    }
    %c0 = arith.constant 0 : index
    %c0_1 = arith.constant 0 : index
    %3 = vector.load %arg21[%c0, %c0_1] : memref<2x32xf32, #tpu.memory_space<vmem>>, vector<2x32xf32>
    %c0_2 = arith.constant 0 : index
    %c0_3 = arith.constant 0 : index
    %c0_4 = arith.constant 0 : index
    %4 = vector.load %arg2[%c0_2, %c0_3, %c0_4] : memref<2x16x32xbf16, #tpu.memory_space<vmem>>, vector<2x16x32xbf16>
    %5 = arith.extf %4 : vector<2x16x32xbf16> to vector<2x16x32xf32>
    %cst = arith.constant dense<0.000000e+00> : vector<2x32xf32>
    %6 = vector.multi_reduction <add>, %5, %cst [1] : vector<2x16x32xf32> to vector<2x32xf32>
    %7 = arith.addf %3, %6 : vector<2x32xf32>
    %c0_5 = arith.constant 0 : index
    %c0_6 = arith.constant 0 : index
    %8 = vector.load %arg21[%c0_5, %c0_6] : memref<2x32xf32, #tpu.memory_space<vmem>>, vector<2x32xf32>
    tpu.vector_store %arg21[%c0_5, %c0_6], %7 {strides = array<i32>} : memref<2x32xf32, #tpu.memory_space<vmem>>, vector<2x32xf32>,
    %c1_i32 = arith.constant 1 : i32
    %9 = arith.cmpi eq, %arg1, %c1_i32 : i32
    %10 = arith.extui %9 : i1 to i32
    %c0_i32_7 = arith.constant 0 : i32
    %11 = arith.cmpi ne, %10, %c0_i32_7 : i32
    scf.if %11 {
      %c0_8 = arith.constant 0 : index
      %c0_9 = arith.constant 0 : index
      %12 = vector.load %arg21[%c0_8, %c0_9] : memref<2x32xf32, #tpu.memory_space<vmem>>, vector<2x32xf32>
      %cst_10 = arith.constant 3.125000e-02 : f32
      %13 = vector.broadcast %cst_10 : f32 to vector<2x32xf32>
      %14 = arith.mulf %12, %13 : vector<2x32xf32>
      %c0_11 = arith.constant 0 : index
      %c0_12 = arith.constant 0 : index
      %c0_13 = arith.constant 0 : index
      %15 = vector.load %arg3[%c0_11, %c0_12, %c0_13] : memref<2x4x32xbf16, #tpu.memory_space<vmem>>, vector<2x4x32xbf16>
      %16 = arith.extf %15 : vector<2x4x32xbf16> to vector<2x4x32xf32>
      %cst_14 = arith.constant dense<0.000000e+00> : vector<2x32xf32>
      %17 = vector.multi_reduction <add>, %16, %cst_14 [1] : vector<2x4x32xf32> to vector<2x32xf32>
      %cst_15 = arith.constant 2.500000e-01 : f32
      %18 = vector.broadcast %cst_15 : f32 to vector<2x32xf32>
      %19 = arith.mulf %17, %18 : vector<2x32xf32>
      %c0_16 = arith.constant 0 : index
      %c0_17 = arith.constant 0 : index
      %20 = vector.load %arg4[%c0_16, %c0_17] : memref<32x32xbf16, #tpu.memory_space<vmem>>, vector<32x32xbf16>
      %c0_18 = arith.constant 0 : index
      %c0_19 = arith.constant 0 : index
      %21 = vector.load %arg5[%c0_18, %c0_19] : memref<1x32xf32, #tpu.memory_space<vmem>>, vector<1x32xf32>
      %c0_20 = arith.constant 0 : index
      %c0_21 = arith.constant 0 : index
      %22 = vector.load %arg6[%c0_20, %c0_21] : memref<32x32xbf16, #tpu.memory_space<vmem>>, vector<32x32xbf16>
      %c0_22 = arith.constant 0 : index
      %c0_23 = arith.constant 0 : index
      %23 = vector.load %arg7[%c0_22, %c0_23] : memref<1x32xf32, #tpu.memory_space<vmem>>, vector<1x32xf32>
      %c0_24 = arith.constant 0 : index
      %c0_25 = arith.constant 0 : index
      %24 = vector.load %arg8[%c0_24, %c0_25] : memref<32x32xbf16, #tpu.memory_space<vmem>>, vector<32x32xbf16>
      %c0_26 = arith.constant 0 : index
      %c0_27 = arith.constant 0 : index
      %25 = vector.load %arg9[%c0_26, %c0_27] : memref<32x32xbf16, #tpu.memory_space<vmem>>, vector<32x32xbf16>
      %c0_28 = arith.constant 0 : index
      %c0_29 = arith.constant 0 : index
      %26 = vector.load %arg10[%c0_28, %c0_29] : memref<1x32xf32, #tpu.memory_space<vmem>>, vector<1x32xf32>
      %c0_30 = arith.constant 0 : index
      %c0_31 = arith.constant 0 : index
      %27 = vector.load %arg11[%c0_30, %c0_31] : memref<1x32xf32, #tpu.memory_space<vmem>>, vector<1x32xf32>
      %c0_32 = arith.constant 0 : index
      %c0_33 = arith.constant 0 : index
      %28 = vector.load %arg12[%c0_32, %c0_33] : memref<1x32xf32, #tpu.memory_space<vmem>>, vector<1x32xf32>
      %c0_34 = arith.constant 0 : index
      %c0_35 = arith.constant 0 : index
      %29 = vector.load %arg13[%c0_34, %c0_35] : memref<32x16xbf16, #tpu.memory_space<vmem>>, vector<32x16xbf16>
      %c0_36 = arith.constant 0 : index
      %c0_37 = arith.constant 0 : index
      %30 = vector.load %arg14[%c0_36, %c0_37] : memref<1x16xf32, #tpu.memory_space<vmem>>, vector<1x16xf32>
      %c0_38 = arith.constant 0 : index
      %c0_39 = arith.constant 0 : index
      %31 = vector.load %arg15[%c0_38, %c0_39] : memref<1x16xf32, #tpu.memory_space<vmem>>, vector<1x16xf32>
      %c0_40 = arith.constant 0 : index
      %c0_41 = arith.constant 0 : index
      %32 = vector.load %arg16[%c0_40, %c0_41] : memref<1x16xf32, #tpu.memory_space<vmem>>, vector<1x16xf32>
      %c0_42 = arith.constant 0 : index
      %c0_43 = arith.constant 0 : index
      %33 = vector.load %arg17[%c0_42, %c0_43] : memref<16x2xbf16, #tpu.memory_space<vmem>>, vector<16x2xbf16>
      %c0_44 = arith.constant 0 : index
      %c0_45 = arith.constant 0 : index
      %34 = vector.load %arg18[%c0_44, %c0_45] : memref<1x2xf32, #tpu.memory_space<vmem>>, vector<1x2xf32>
      %35 = arith.truncf %14 : vector<2x32xf32> to vector<2x32xbf16>
      %cst_46 = arith.constant dense<0.000000e+00> : vector<2x32xf32>
      %36 = tpu.matmul %35, %20, %cst_46 {dimension_numbers = #tpu.dot_dimension_numbers<[1], [0], [0], [1], [0, 0, 1, 1], [], []>} : vector<2x32xbf16>, vector<32x32xbf16>, vector<2x32xf32> -> vector<2x32xf32>
      %37 = vector.broadcast %21 : vector<1x32xf32> to vector<2x32xf32>
      %38 = arith.addf %36, %37 : vector<2x32xf32>
      %39 = arith.truncf %19 : vector<2x32xf32> to vector<2x32xbf16>
      %cst_47 = arith.constant dense<0.000000e+00> : vector<2x32xf32>
      %40 = tpu.matmul %39, %22, %cst_47 {dimension_numbers = #tpu.dot_dimension_numbers<[1], [0], [0], [1], [0, 0, 1, 1], [], []>} : vector<2x32xbf16>, vector<32x32xbf16>, vector<2x32xf32> -> vector<2x32xf32>
      %41 = vector.broadcast %23 : vector<1x32xf32> to vector<2x32xf32>
      %42 = arith.addf %40, %41 : vector<2x32xf32>
      %43 = arith.truncf %38 : vector<2x32xf32> to vector<2x32xbf16>
      %cst_48 = arith.constant dense<0.000000e+00> : vector<2x32xf32>
      %44 = tpu.matmul %43, %24, %cst_48 {dimension_numbers = #tpu.dot_dimension_numbers<[1], [0], [0], [1], [0, 0, 1, 1], [], []>} : vector<2x32xbf16>, vector<32x32xbf16>, vector<2x32xf32> -> vector<2x32xf32>
      %45 = arith.truncf %42 : vector<2x32xf32> to vector<2x32xbf16>
      %cst_49 = arith.constant dense<0.000000e+00> : vector<2x32xf32>
      %46 = tpu.matmul %45, %25, %cst_49 {dimension_numbers = #tpu.dot_dimension_numbers<[1], [0], [0], [1], [0, 0, 1, 1], [], []>} : vector<2x32xbf16>, vector<32x32xbf16>, vector<2x32xf32> -> vector<2x32xf32>
      %47 = arith.addf %44, %46 : vector<2x32xf32>
      %48 = vector.broadcast %26 : vector<1x32xf32> to vector<2x32xf32>
      %49 = arith.addf %47, %48 : vector<2x32xf32>
      %cst_50 = arith.constant dense<0.000000e+00> : vector<2xf32>
      %50 = vector.multi_reduction <add>, %49, %cst_50 [1] : vector<2x32xf32> to vector<2xf32>
      %51 = vector.shape_cast %50 : vector<2xf32> to vector<2x1xf32>
      %cst_51 = arith.constant 3.200000e+01 : f32
      %52 = vector.broadcast %cst_51 : f32 to vector<2x1xf32>
      %53 = arith.divf %51, %52 : vector<2x1xf32>
      %54 = vector.broadcast %53 : vector<2x1xf32> to vector<2x32xf32>
      %55 = arith.subf %49, %54 : vector<2x32xf32>
      %56 = arith.mulf %55, %55 : vector<2x32xf32>
      %cst_52 = arith.constant dense<0.000000e+00> : vector<2xf32>
      %57 = vector.multi_reduction <add>, %56, %cst_52 [1] : vector<2x32xf32> to vector<2xf32>
      %58 = vector.shape_cast %57 : vector<2xf32> to vector<2x1xf32>
      %cst_53 = arith.constant 3.200000e+01 : f32
      %59 = vector.broadcast %cst_53 : f32 to vector<2x1xf32>
      %60 = arith.divf %58, %59 : vector<2x1xf32>
      %61 = vector.broadcast %53 : vector<2x1xf32> to vector<2x32xf32>
      %62 = arith.subf %49, %61 : vector<2x32xf32>
      %cst_54 = arith.constant 9.99999974E-6 : f32
      %63 = vector.broadcast %cst_54 : f32 to vector<2x1xf32>
      %64 = arith.addf %60, %63 : vector<2x1xf32>
      %65 = math.rsqrt %64 : vector<2x1xf32>
      %66 = vector.broadcast %65 : vector<2x1xf32> to vector<2x32xf32>
      %67 = arith.mulf %62, %66 : vector<2x32xf32>
      %68 = vector.broadcast %27 : vector<1x32xf32> to vector<2x32xf32>
      %69 = arith.mulf %67, %68 : vector<2x32xf32>
      %70 = vector.broadcast %28 : vector<1x32xf32> to vector<2x32xf32>
      %71 = arith.addf %69, %70 : vector<2x32xf32>
      %cst_55 = arith.constant 5.000000e-01 : f32
      %72 = vector.broadcast %cst_55 : f32 to vector<2x32xf32>
      %73 = arith.mulf %72, %71 : vector<2x32xf32>
      %cst_56 = arith.constant 0.707106769 : f32
      %74 = vector.broadcast %cst_56 : f32 to vector<2x32xf32>
      %75 = arith.mulf %71, %74 : vector<2x32xf32>
      %76 = math.erf %75 : vector<2x32xf32>
      %cst_57 = arith.constant 1.000000e+00 : f32
      %77 = vector.broadcast %cst_57 : f32 to vector<2x32xf32>
      %78 = arith.addf %77, %76 : vector<2x32xf32>
      %79 = arith.mulf %73, %78 : vector<2x32xf32>
      %80 = arith.truncf %79 : vector<2x32xf32> to vector<2x32xbf16>
      %cst_58 = arith.constant dense<0.000000e+00> : vector<2x16xf32>
      %81 = tpu.matmul %80, %29, %cst_58 {dimension_numbers = #tpu.dot_dimension_numbers<[1], [0], [0], [1], [0, 0, 1, 1], [], []>} : vector<2x32xbf16>, vector<32x16xbf16>, vector<2x16xf32> -> vector<2x16xf32>
      %82 = vector.broadcast %30 : vector<1x16xf32> to vector<2x16xf32>
      %83 = arith.addf %81, %82 : vector<2x16xf32>
      %cst_59 = arith.constant dense<0.000000e+00> : vector<2xf32>
      %84 = vector.multi_reduction <add>, %83, %cst_59 [1] : vector<2x16xf32> to vector<2xf32>
      %85 = vector.shape_cast %84 : vector<2xf32> to vector<2x1xf32>
      %cst_60 = arith.constant 1.600000e+01 : f32
      %86 = vector.broadcast %cst_60 : f32 to vector<2x1xf32>
      %87 = arith.divf %85, %86 : vector<2x1xf32>
      %88 = vector.broadcast %87 : vector<2x1xf32> to vector<2x16xf32>
      %89 = arith.subf %83, %88 : vector<2x16xf32>
      %90 = arith.mulf %89, %89 : vector<2x16xf32>
      %cst_61 = arith.constant dense<0.000000e+00> : vector<2xf32>
      %91 = vector.multi_reduction <add>, %90, %cst_61 [1] : vector<2x16xf32> to vector<2xf32>
      %92 = vector.shape_cast %91 : vector<2xf32> to vector<2x1xf32>
      %cst_62 = arith.constant 1.600000e+01 : f32
      %93 = vector.broadcast %cst_62 : f32 to vector<2x1xf32>
      %94 = arith.divf %92, %93 : vector<2x1xf32>
      %95 = vector.broadcast %87 : vector<2x1xf32> to vector<2x16xf32>
      %96 = arith.subf %83, %95 : vector<2x16xf32>
      %cst_63 = arith.constant 9.99999974E-6 : f32
      %97 = vector.broadcast %cst_63 : f32 to vector<2x1xf32>
      %98 = arith.addf %94, %97 : vector<2x1xf32>
      %99 = math.rsqrt %98 : vector<2x1xf32>
      %100 = vector.broadcast %99 : vector<2x1xf32> to vector<2x16xf32>
      %101 = arith.mulf %96, %100 : vector<2x16xf32>
      %102 = vector.broadcast %31 : vector<1x16xf32> to vector<2x16xf32>
      %103 = arith.mulf %101, %102 : vector<2x16xf32>
      %104 = vector.broadcast %32 : vector<1x16xf32> to vector<2x16xf32>
      %105 = arith.addf %103, %104 : vector<2x16xf32>
      %cst_64 = arith.constant 5.000000e-01 : f32
      %106 = vector.broadcast %cst_64 : f32 to vector<2x16xf32>
      %107 = arith.mulf %106, %105 : vector<2x16xf32>
      %cst_65 = arith.constant 0.707106769 : f32
      %108 = vector.broadcast %cst_65 : f32 to vector<2x16xf32>
      %109 = arith.mulf %105, %108 : vector<2x16xf32>
      %110 = math.erf %109 : vector<2x16xf32>
      %cst_66 = arith.constant 1.000000e+00 : f32
      %111 = vector.broadcast %cst_66 : f32 to vector<2x16xf32>
      %112 = arith.addf %111, %110 : vector<2x16xf32>
      %113 = arith.mulf %107, %112 : vector<2x16xf32>
      %114 = arith.truncf %113 : vector<2x16xf32> to vector<2x16xbf16>
      %cst_67 = arith.constant dense<0.000000e+00> : vector<2x2xf32>
      %115 = tpu.matmul %114, %33, %cst_67 {dimension_numbers = #tpu.dot_dimension_numbers<[1], [0], [0], [1], [0, 0, 1, 1], [], []>} : vector<2x16xbf16>, vector<16x2xbf16>, vector<2x2xf32> -> vector<2x2xf32>
      %116 = vector.broadcast %34 : vector<1x2xf32> to vector<2x2xf32>
      %117 = arith.addf %115, %116 : vector<2x2xf32>
      %c0_68 = arith.constant 0 : index
      %c0_69 = arith.constant 0 : index
      %118 = vector.load %arg20[%c0_68, %c0_69] : memref<2x32xf32, #tpu.memory_space<vmem>>, vector<2x32xf32>
      tpu.vector_store %arg20[%c0_68, %c0_69], %79 {strides = array<i32>} : memref<2x32xf32, #tpu.memory_space<vmem>>, vector<2x32xf32>,
      %c0_70 = arith.constant 0 : index
      %c0_71 = arith.constant 0 : index
      %119 = vector.load %arg19[%c0_70, %c0_71] : memref<2x2xf32, #tpu.memory_space<vmem>>, vector<2x2xf32>
      tpu.vector_store %arg19[%c0_70, %c0_71], %117 {strides = array<i32>} : memref<2x2xf32, #tpu.memory_space<vmem>>, vector<2x2xf32>,
    } else {
    }
    return
  }
  func.func @transform_0(%arg0: i32, %arg1: i32) -> (i32, i32, i32) {
    %c0_i32 = arith.constant 0 : i32
    %c0_i32_0 = arith.constant 0 : i32
    return %arg0, %arg1, %c0_i32 : i32, i32, i32
  }
  func.func @transform_1(%arg0: i32, %arg1: i32) -> (i32, i32, i32) {
    %c0_i32 = arith.constant 0 : i32
    %c0_i32_0 = arith.constant 0 : i32
    %c0_i32_1 = arith.constant 0 : i32
    return %arg0, %c0_i32, %c0_i32_0 : i32, i32, i32
  }
  func.func @transform_2(%arg0: i32, %arg1: i32) -> (i32, i32) {
    %c0_i32 = arith.constant 0 : i32
    %c0_i32_0 = arith.constant 0 : i32
    %c0_i32_1 = arith.constant 0 : i32
    return %c0_i32, %c0_i32_0 : i32, i32
  }
  func.func @transform_3(%arg0: i32, %arg1: i32) -> (i32, i32) {
    %c0_i32 = arith.constant 0 : i32
    %c0_i32_0 = arith.constant 0 : i32
    %c0_i32_1 = arith.constant 0 : i32
    return %c0_i32, %c0_i32_0 : i32, i32
  }
  func.func @transform_4(%arg0: i32, %arg1: i32) -> (i32, i32) {
    %c0_i32 = arith.constant 0 : i32
    %c0_i32_0 = arith.constant 0 : i32
    %c0_i32_1 = arith.constant 0 : i32
    return %c0_i32, %c0_i32_0 : i32, i32
  }
  func.func @transform_5(%arg0: i32, %arg1: i32) -> (i32, i32) {
    %c0_i32 = arith.constant 0 : i32
    %c0_i32_0 = arith.constant 0 : i32
    %c0_i32_1 = arith.constant 0 : i32
    return %c0_i32, %c0_i32_0 : i32, i32
  }
  func.func @transform_6(%arg0: i32, %arg1: i32) -> (i32, i32) {
    %c0_i32 = arith.constant 0 : i32
    %c0_i32_0 = arith.constant 0 : i32
    %c0_i32_1 = arith.constant 0 : i32
    return %c0_i32, %c0_i32_0 : i32, i32
  }
  func.func @transform_7(%arg0: i32, %arg1: i32) -> (i32, i32) {
    %c0_i32 = arith.constant 0 : i32
    %c0_i32_0 = arith.constant 0 : i32
    %c0_i32_1 = arith.constant 0 : i32
    return %c0_i32, %c0_i32_0 : i32, i32
  }
  func.func @transform_8(%arg0: i32, %arg1: i32) -> (i32, i32) {
    %c0_i32 = arith.constant 0 : i32
    %c0_i32_0 = arith.constant 0 : i32
    %c0_i32_1 = arith.constant 0 : i32
    return %c0_i32, %c0_i32_0 : i32, i32
  }
  func.func @transform_9(%arg0: i32, %arg1: i32) -> (i32, i32) {
    %c0_i32 = arith.constant 0 : i32
    %c0_i32_0 = arith.constant 0 : i32
    %c0_i32_1 = arith.constant 0 : i32
    return %c0_i32, %c0_i32_0 : i32, i32
  }
  func.func @transform_10(%arg0: i32, %arg1: i32) -> (i32, i32) {
    %c0_i32 = arith.constant 0 : i32
    %c0_i32_0 = arith.constant 0 : i32
    %c0_i32_1 = arith.constant 0 : i32
    return %c0_i32, %c0_i32_0 : i32, i32
  }
  func.func @transform_11(%arg0: i32, %arg1: i32) -> (i32, i32) {
    %c0_i32 = arith.constant 0 : i32
    %c0_i32_0 = arith.constant 0 : i32
    %c0_i32_1 = arith.constant 0 : i32
    return %c0_i32, %c0_i32_0 : i32, i32
  }
  func.func @transform_12(%arg0: i32, %arg1: i32) -> (i32, i32) {
    %c0_i32 = arith.constant 0 : i32
    %c0_i32_0 = arith.constant 0 : i32
    %c0_i32_1 = arith.constant 0 : i32
    return %c0_i32, %c0_i32_0 : i32, i32
  }
  func.func @transform_13(%arg0: i32, %arg1: i32) -> (i32, i32) {
    %c0_i32 = arith.constant 0 : i32
    %c0_i32_0 = arith.constant 0 : i32
    %c0_i32_1 = arith.constant 0 : i32
    return %c0_i32, %c0_i32_0 : i32, i32
  }
  func.func @transform_14(%arg0: i32, %arg1: i32) -> (i32, i32) {
    %c0_i32 = arith.constant 0 : i32
    %c0_i32_0 = arith.constant 0 : i32
    %c0_i32_1 = arith.constant 0 : i32
    return %c0_i32, %c0_i32_0 : i32, i32
  }
  func.func @transform_15(%arg0: i32, %arg1: i32) -> (i32, i32) {
    %c0_i32 = arith.constant 0 : i32
    %c0_i32_0 = arith.constant 0 : i32
    %c0_i32_1 = arith.constant 0 : i32
    return %c0_i32, %c0_i32_0 : i32, i32
  }
  func.func @transform_16(%arg0: i32, %arg1: i32) -> (i32, i32) {
    %c0_i32 = arith.constant 0 : i32
    %c0_i32_0 = arith.constant 0 : i32
    %c0_i32_1 = arith.constant 0 : i32
    return %c0_i32, %c0_i32_0 : i32, i32
  }
  func.func @transform_17(%arg0: i32, %arg1: i32) -> (i32, i32) {
    %c0_i32 = arith.constant 0 : i32
    %c0_i32_0 = arith.constant 0 : i32
    return %arg0, %c0_i32 : i32, i32
  }
  func.func @transform_18(%arg0: i32, %arg1: i32) -> (i32, i32) {
    %c0_i32 = arith.constant 0 : i32
    %c0_i32_0 = arith.constant 0 : i32
    return %arg0, %c0_i32 : i32, i32
  }
}

</mosaic_0001>

<llo_original>
// kernel: tpu_custom_call.1
$region0: #{tpu_custom_call.1}
  #allocation0 [shape = 'u32[]', space=smem, size = 0x4, offset = 0x4, fixed_abs, tag = 'smem constant byte address 0x4 - core index']
  #allocation1 [shape = 'u32[72,128]{1,0:T(1,128)}', space=vmem, size = 0x9000, scoped, tag = 'internal scratch']
  #allocation2 [shape = 'f32[2,32]{1,0:T(2,128)}', space=vmem, size = 0x400, scoped, tag = 'scratch operand']
  #allocation14 [shape = 's32[]', space=sflag, size = 0x4, offset = 0, fixed_abs, tag = 'sflag constant byte address 0x0 - dummy sync flag']
  %s0 = inlined_call_operand.hbm [shape: bf16[2,32,32], index: 0, kind: input, shape index: {}]
  %s1 = inlined_call_operand.vmem [shape: bf16[2,4,32], index: 1, kind: input, shape index: {}]
  %s2 = inlined_call_operand.vmem [shape: bf16[32,32], index: 2, kind: input, shape index: {}]
  %s3 = inlined_call_operand.vmem [shape: f32[1,32], index: 3, kind: input, shape index: {}]
  %s4 = inlined_call_operand.hbm [shape: bf16[32,32], index: 4, kind: input, shape index: {}]
  %s5 = inlined_call_operand.vmem [shape: f32[1,32], index: 5, kind: input, shape index: {}]
  %s6 = inlined_call_operand.hbm [shape: bf16[32,32], index: 6, kind: input, shape index: {}]
  %s7 = inlined_call_operand.hbm [shape: bf16[32,32], index: 7, kind: input, shape index: {}]
  %s8 = inlined_call_operand.vmem [shape: f32[1,32], index: 8, kind: input, shape index: {}]
  %s9 = inlined_call_operand.vmem [shape: f32[1,32], index: 9, kind: input, shape index: {}]
  %s10 = inlined_call_operand.vmem [shape: f32[1,32], index: 10, kind: input, shape index: {}]
  %s11 = inlined_call_operand.vmem [shape: bf16[32,16], index: 11, kind: input, shape index: {}]
  %s12 = inlined_call_operand.vmem [shape: f32[1,16], index: 12, kind: input, shape index: {}]
  %s13 = inlined_call_operand.vmem [shape: f32[1,16], index: 13, kind: input, shape index: {}]
  %s14 = inlined_call_operand.vmem [shape: f32[1,16], index: 14, kind: input, shape index: {}]
  %s15 = inlined_call_operand.vmem [shape: bf16[16,2], index: 15, kind: input, shape index: {}]
  %s16 = inlined_call_operand.vmem [shape: f32[1,2], index: 16, kind: input, shape index: {}]
  %s17 = inlined_call_operand.hbm [shape: f32[2,2], index: 17, kind: output, shape index: {0}]
  %s18 = inlined_call_operand.hbm [shape: f32[2,32], index: 18, kind: output, shape index: {1}]
  %19 = xla_tuple %s17, %s18
  %s20 = sld [smem:[#allocation0]]
  $region133: #{tpu_custom_call.1} parent=0
    _
  %s22 = ssub.s32 1, %s20
  %s23 = scalar_select 0, %s22, %s20
  $region1: #{tpu_custom_call.1} parent=0
    #allocation3 [shape = 'u8[16384]{0}', space=vmem, size = 0x4000, scoped, tag = 'input window, operand 0']
    #allocation4 [shape = 's32[2]{0}', space=sflag, size = 0x8, scoped, tag = 'scoped memory for tpu_custom_call.1']
    #allocation5 [shape = 's32[2]{0}', space=sflag, size = 0x8, scoped, tag = 'scoped memory for tpu_custom_call.1']
    #allocation6 [shape = 'u8[8192]{0}', space=vmem, size = 0x2000, scoped, tag = 'input window, operand 4, single buffered']
    #allocation7 [shape = 's32[1]{0}', space=sflag, size = 0x4, scoped, tag = 'scoped memory for tpu_custom_call.1']
    #allocation8 [shape = 'u8[8192]{0}', space=vmem, size = 0x2000, scoped, tag = 'input window, operand 6, single buffered']
    #allocation9 [shape = 'u8[8192]{0}', space=vmem, size = 0x2000, scoped, tag = 'input window, operand 7, single buffered']
    #allocation10 [shape = 's32[1]{0}', space=sflag, size = 0x4, scoped, tag = 'scoped memory for tpu_custom_call.1']
    #allocation11 [shape = 'u8[1024]{0}', space=vmem, size = 0x400, scoped, tag = 'output window, operand 0, single buffered']
    #allocation12 [shape = 'u8[1024]{0}', space=vmem, size = 0x400, scoped, tag = 'output window, operand 1, single buffered']
    #allocation13 [shape = 's32[1]{0}', space=sflag, size = 0x4, scoped, tag = 'scoped memory for tpu_custom_call.1']
    %24 = vsyncpa [#allocation4], 0
    %s25 = scalar_lea.sflag [#allocation4], 1
    %26 = vsyncpa %s25, 0
    %27 = vsyncpa [#allocation7], 0
    %28 = vsyncpa [#allocation10], 0
    %29 = vsyncpa [#allocation5], 0
    %30 = vsyncpa [#allocation13], 0
    loop: start=0, step=1, limit=4
    $region2: #{tpu_custom_call.1} parent=1 // loop_pre_header
      _
    $region3: #{tpu_custom_call.1} parent=1 // loop_header
      %s32 = sphi 0, %s36
      %p33 = scmp.ge.s32.totalorder %s32, 4
      %s39 = sphi 0, %s51
      %s40 = sphi 0, %s47
      %s41 = sphi 0, %s39
      %s42 = sphi 0, %s40
      %s43 = sphi 0, %s41
      %s44 = sphi 0, %s42
      %s56 = sphi 0, %s58
      %s59 = sphi 0, %s56
      %s60 = sphi 0, %s59
      %s76 = sphi 0, %s60
      %s82 = sphi 0, %s84
      %s85 = sphi 0, %s82
      %s86 = sphi 0, %s85
      %s102 = sphi 0, %s86
      %s106 = sphi 0, %s106
      %s108 = sphi 0, %s106
      %s109 = sphi 0, %s108
      %s123 = sphi 0, %s109
      %s127 = sphi 0, %s127
      %s129 = sphi 0, %s127
      %s130 = sphi 0, %s129
      %s144 = sphi 0, %s130
      %s148 = sphi 0, %s148
      %s150 = sphi 0, %s148
      %s151 = sphi 0, %s150
      %s165 = sphi 0, %s151
      %s169 = sphi 0, %s169
      %s171 = sphi 0, %s169
      %s172 = sphi 0, %s171
      %s186 = sphi 0, %s172
      %s190 = sphi 0, %s190
      %s192 = sphi 0, %s190
      %s193 = sphi 0, %s192
      %s207 = sphi 0, %s193
      %s211 = sphi 0, %s211
      %s213 = sphi 0, %s211
      %s214 = sphi 0, %s213
      %s228 = sphi 0, %s214
      %s232 = sphi 0, %s232
      %s234 = sphi 0, %s232
      %s235 = sphi 0, %s234
      %s249 = sphi 0, %s235
      %s253 = sphi 0, %s253
      %s255 = sphi 0, %s253
      %s256 = sphi 0, %s255
      %s270 = sphi 0, %s256
      %s274 = sphi 0, %s274
      %s276 = sphi 0, %s274
      %s277 = sphi 0, %s276
      %s291 = sphi 0, %s277
      %s295 = sphi 0, %s295
      %s297 = sphi 0, %s295
      %s298 = sphi 0, %s297
      %s312 = sphi 0, %s298
      %s316 = sphi 0, %s316
      %s318 = sphi 0, %s316
      %s319 = sphi 0, %s318
      %s333 = sphi 0, %s319
      %s337 = sphi 0, %s337
      %s339 = sphi 0, %s337
      %s340 = sphi 0, %s339
      %s354 = sphi 0, %s340
      %s358 = sphi 0, %s358
      %s360 = sphi 0, %s358
      %s361 = sphi 0, %s360
      %s375 = sphi 0, %s361
      %s379 = sphi 0, %s379
      %s381 = sphi 0, %s379
      %s382 = sphi 0, %s381
      %s396 = sphi 0, %s382
      %s400 = sphi 0, %s400
      %s402 = sphi 0, %s400
      %s403 = sphi 0, %s402
      %s417 = sphi 0, %s403
      %s423 = sphi 0, %s425
      %s426 = sphi 0, %s423
      %s427 = sphi 0, %s426
      %s443 = sphi 0, %s427
      %s449 = sphi 0, %s451
      %s452 = sphi 0, %s449
      %s453 = sphi 0, %s452
      %s469 = sphi 0, %s453
    $region4: #{tpu_custom_call.1} parent=1 // loop_header_branch
      %35 = sbr.rel (%p33) target = $region8
    $region5: #{tpu_custom_call.1} parent=1 // loop_body
      %s37 = ssub.s32 %s32, 1
      %s38 = ssub.s32 %s32, 2
      %s45 = sadd.s32 1, %s40
      %p46 = scmp.ge.s32.totalorder %s45, 2
      %s47 = scalar_select %p46, 0, %s45
      %s48 = sadd.s32 1, %s39
      %s49 = scalar_select %p46, %s48, %s39
      %p50 = scmp.ge.s32.totalorder %s49, 1
      %s51 = scalar_select %p50, 0, %s49
      %s52 = ssub.s32 %s39, %s51
      %s53 = ssub.s32 %s40, %s47
      %s54 = sor.u32 %s52, %s53
      %p55 = scmp.eq.s32.totalorder %s54, 0
      %s57 = sadd.s32 %s56, 1
      %s58 = scalar_select %p55, %s56, %s57
      %p61 = pneg %p55
      %p62 = scmp.eq.s32.totalorder %s32, 1
      %p63 = por %p61, %p62
      %p64 = scmp.ne.s32.totalorder %s56, %s59
      %p65 = scmp.eq.s32.totalorder %s32, 0
      %p66 = por %p64, %p65
      %p67 = scmp.ne.s32.totalorder %s56, %s59
      %p68 = scmp.eq.s32.totalorder %s37, 1
      %p69 = por %p67, %p68
      %p70 = scmp.ne.s32.totalorder %s59, %s60
      %p71 = scmp.eq.s32.totalorder %s37, 0
      %p72 = por %p70, %p71
      %p73 = scmp.ne.s32.totalorder %s59, %s60
      %p74 = scmp.eq.s32.totalorder %s38, 1
      %p75 = por %p73, %p74
      %p77 = scmp.ne.s32.totalorder %s60, %s76
      %p78 = scmp.eq.s32.totalorder %s38, 0
      %p79 = por %p77, %p78
      %s80 = ssub.s32 %s39, %s51
      %p81 = scmp.eq.s32.totalorder %s80, 0
      %s83 = sadd.s32 %s82, 1
      %s84 = scalar_select %p81, %s82, %s83
      %p87 = pneg %p81
      %p88 = scmp.eq.s32.totalorder %s32, 1
      %p89 = por %p87, %p88
      %p90 = scmp.ne.s32.totalorder %s82, %s85
      %p91 = scmp.eq.s32.totalorder %s32, 0
      %p92 = por %p90, %p91
      %p93 = scmp.ne.s32.totalorder %s82, %s85
      %p94 = scmp.eq.s32.totalorder %s37, 1
      %p95 = por %p93, %p94
      %p96 = scmp.ne.s32.totalorder %s85, %s86
      %p97 = scmp.eq.s32.totalorder %s37, 0
      %p98 = por %p96, %p97
      %p99 = scmp.ne.s32.totalorder %s85, %s86
      %p100 = scmp.eq.s32.totalorder %s38, 1
      %p101 = por %p99, %p100
      %p103 = scmp.ne.s32.totalorder %s86, %s102
      %p104 = scmp.eq.s32.totalorder %s38, 0
      %p105 = por %p103, %p104
      %s107 = sadd.s32 %s106, 1
      %p110 = scmp.eq.s32.totalorder %s32, 1
      %p111 = scmp.ne.s32.totalorder %s106, %s108
      %p112 = scmp.eq.s32.totalorder %s32, 0
      %p113 = por %p111, %p112
      %p114 = scmp.ne.s32.totalorder %s106, %s108
      %p115 = scmp.eq.s32.totalorder %s37, 1
      %p116 = por %p114, %p115
      %p117 = scmp.ne.s32.totalorder %s108, %s109
      %p118 = scmp.eq.s32.totalorder %s37, 0
      %p119 = por %p117, %p118
      %p120 = scmp.ne.s32.totalorder %s108, %s109
      %p121 = scmp.eq.s32.totalorder %s38, 1
      %p122 = por %p120, %p121
      %p124 = scmp.ne.s32.totalorder %s109, %s123
      %p125 = scmp.eq.s32.totalorder %s38, 0
      %p126 = por %p124, %p125
      %s128 = sadd.s32 %s127, 1
      %p131 = scmp.eq.s32.totalorder %s32, 1
      %p132 = scmp.ne.s32.totalorder %s127, %s129
      %p133 = scmp.eq.s32.totalorder %s32, 0
      %p134 = por %p132, %p133
      %p135 = scmp.ne.s32.totalorder %s127, %s129
      %p136 = scmp.eq.s32.totalorder %s37, 1
      %p137 = por %p135, %p136
      %p138 = scmp.ne.s32.totalorder %s129, %s130
      %p139 = scmp.eq.s32.totalorder %s37, 0
      %p140 = por %p138, %p139
      %p141 = scmp.ne.s32.totalorder %s129, %s130
      %p142 = scmp.eq.s32.totalorder %s38, 1
      %p143 = por %p141, %p142
      %p145 = scmp.ne.s32.totalorder %s130, %s144
      %p146 = scmp.eq.s32.totalorder %s38, 0
      %p147 = por %p145, %p146
      %s149 = sadd.s32 %s148, 1
      %p152 = scmp.eq.s32.totalorder %s32, 1
      %p153 = scmp.ne.s32.totalorder %s148, %s150
      %p154 = scmp.eq.s32.totalorder %s32, 0
      %p155 = por %p153, %p154
      %p156 = scmp.ne.s32.totalorder %s148, %s150
      %p157 = scmp.eq.s32.totalorder %s37, 1
      %p158 = por %p156, %p157
      %p159 = scmp.ne.s32.totalorder %s150, %s151
      %p160 = scmp.eq.s32.totalorder %s37, 0
      %p161 = por %p159, %p160
      %p162 = scmp.ne.s32.totalorder %s150, %s151
      %p163 = scmp.eq.s32.totalorder %s38, 1
      %p164 = por %p162, %p163
      %p166 = scmp.ne.s32.totalorder %s151, %s165
      %p167 = scmp.eq.s32.totalorder %s38, 0
      %p168 = por %p166, %p167
      %s170 = sadd.s32 %s169, 1
      %p173 = scmp.eq.s32.totalorder %s32, 1
      %p174 = scmp.ne.s32.totalorder %s169, %s171
      %p175 = scmp.eq.s32.totalorder %s32, 0
      %p176 = por %p174, %p175
      %p177 = scmp.ne.s32.totalorder %s169, %s171
      %p178 = scmp.eq.s32.totalorder %s37, 1
      %p179 = por %p177, %p178
      %p180 = scmp.ne.s32.totalorder %s171, %s172
      %p181 = scmp.eq.s32.totalorder %s37, 0
      %p182 = por %p180, %p181
      %p183 = scmp.ne.s32.totalorder %s171, %s172
      %p184 = scmp.eq.s32.totalorder %s38, 1
      %p185 = por %p183, %p184
      %p187 = scmp.ne.s32.totalorder %s172, %s186
      %p188 = scmp.eq.s32.totalorder %s38, 0
      %p189 = por %p187, %p188
      %s191 = sadd.s32 %s190, 1
      %p194 = scmp.eq.s32.totalorder %s32, 1
      %p195 = scmp.ne.s32.totalorder %s190, %s192
      %p196 = scmp.eq.s32.totalorder %s32, 0
      %p197 = por %p195, %p196
      %p198 = scmp.ne.s32.totalorder %s190, %s192
      %p199 = scmp.eq.s32.totalorder %s37, 1
      %p200 = por %p198, %p199
      %p201 = scmp.ne.s32.totalorder %s192, %s193
      %p202 = scmp.eq.s32.totalorder %s37, 0
      %p203 = por %p201, %p202
      %p204 = scmp.ne.s32.totalorder %s192, %s193
      %p205 = scmp.eq.s32.totalorder %s38, 1
      %p206 = por %p204, %p205
      %p208 = scmp.ne.s32.totalorder %s193, %s207
      %p209 = scmp.eq.s32.totalorder %s38, 0
      %p210 = por %p208, %p209
      %s212 = sadd.s32 %s211, 1
      %p215 = scmp.eq.s32.totalorder %s32, 1
      %p216 = scmp.ne.s32.totalorder %s211, %s213
      %p217 = scmp.eq.s32.totalorder %s32, 0
      %p218 = por %p216, %p217
      %p219 = scmp.ne.s32.totalorder %s211, %s213
      %p220 = scmp.eq.s32.totalorder %s37, 1
      %p221 = por %p219, %p220
      %p222 = scmp.ne.s32.totalorder %s213, %s214
      %p223 = scmp.eq.s32.totalorder %s37, 0
      %p224 = por %p222, %p223
      %p225 = scmp.ne.s32.totalorder %s213, %s214
      %p226 = scmp.eq.s32.totalorder %s38, 1
      %p227 = por %p225, %p226
      %p229 = scmp.ne.s32.totalorder %s214, %s228
      %p230 = scmp.eq.s32.totalorder %s38, 0
      %p231 = por %p229, %p230
      %s233 = sadd.s32 %s232, 1
      %p236 = scmp.eq.s32.totalorder %s32, 1
      %p237 = scmp.ne.s32.totalorder %s232, %s234
      %p238 = scmp.eq.s32.totalorder %s32, 0
      %p239 = por %p237, %p238
      %p240 = scmp.ne.s32.totalorder %s232, %s234
      %p241 = scmp.eq.s32.totalorder %s37, 1
      %p242 = por %p240, %p241
      %p243 = scmp.ne.s32.totalorder %s234, %s235
      %p244 = scmp.eq.s32.totalorder %s37, 0
      %p245 = por %p243, %p244
      %p246 = scmp.ne.s32.totalorder %s234, %s235
      %p247 = scmp.eq.s32.totalorder %s38, 1
      %p248 = por %p246, %p247
      %p250 = scmp.ne.s32.totalorder %s235, %s249
      %p251 = scmp.eq.s32.totalorder %s38, 0
      %p252 = por %p250, %p251
      %s254 = sadd.s32 %s253, 1
      %p257 = scmp.eq.s32.totalorder %s32, 1
      %p258 = scmp.ne.s32.totalorder %s253, %s255
      %p259 = scmp.eq.s32.totalorder %s32, 0
      %p260 = por %p258, %p259
      %p261 = scmp.ne.s32.totalorder %s253, %s255
      %p262 = scmp.eq.s32.totalorder %s37, 1
      %p263 = por %p261, %p262
      %p264 = scmp.ne.s32.totalorder %s255, %s256
      %p265 = scmp.eq.s32.totalorder %s37, 0
      %p266 = por %p264, %p265
      %p267 = scmp.ne.s32.totalorder %s255, %s256
      %p268 = scmp.eq.s32.totalorder %s38, 1
      %p269 = por %p267, %p268
      %p271 = scmp.ne.s32.totalorder %s256, %s270
      %p272 = scmp.eq.s32.totalorder %s38, 0
      %p273 = por %p271, %p272
      %s275 = sadd.s32 %s274, 1
      %p278 = scmp.eq.s32.totalorder %s32, 1
      %p279 = scmp.ne.s32.totalorder %s274, %s276
      %p280 = scmp.eq.s32.totalorder %s32, 0
      %p281 = por %p279, %p280
      %p282 = scmp.ne.s32.totalorder %s274, %s276
      %p283 = scmp.eq.s32.totalorder %s37, 1
      %p284 = por %p282, %p283
      %p285 = scmp.ne.s32.totalorder %s276, %s277
      %p286 = scmp.eq.s32.totalorder %s37, 0
      %p287 = por %p285, %p286
      %p288 = scmp.ne.s32.totalorder %s276, %s277
      %p289 = scmp.eq.s32.totalorder %s38, 1
      %p290 = por %p288, %p289
      %p292 = scmp.ne.s32.totalorder %s277, %s291
      %p293 = scmp.eq.s32.totalorder %s38, 0
      %p294 = por %p292, %p293
      %s296 = sadd.s32 %s295, 1
      %p299 = scmp.eq.s32.totalorder %s32, 1
      %p300 = scmp.ne.s32.totalorder %s295, %s297
      %p301 = scmp.eq.s32.totalorder %s32, 0
      %p302 = por %p300, %p301
      %p303 = scmp.ne.s32.totalorder %s295, %s297
      %p304 = scmp.eq.s32.totalorder %s37, 1
      %p305 = por %p303, %p304
      %p306 = scmp.ne.s32.totalorder %s297, %s298
      %p307 = scmp.eq.s32.totalorder %s37, 0
      %p308 = por %p306, %p307
      %p309 = scmp.ne.s32.totalorder %s297, %s298
      %p310 = scmp.eq.s32.totalorder %s38, 1
      %p311 = por %p309, %p310
      %p313 = scmp.ne.s32.totalorder %s298, %s312
      %p314 = scmp.eq.s32.totalorder %s38, 0
      %p315 = por %p313, %p314
      %s317 = sadd.s32 %s316, 1
      %p320 = scmp.eq.s32.totalorder %s32, 1
      %p321 = scmp.ne.s32.totalorder %s316, %s318
      %p322 = scmp.eq.s32.totalorder %s32, 0
      %p323 = por %p321, %p322
      %p324 = scmp.ne.s32.totalorder %s316, %s318
      %p325 = scmp.eq.s32.totalorder %s37, 1
      %p326 = por %p324, %p325
      %p327 = scmp.ne.s32.totalorder %s318, %s319
      %p328 = scmp.eq.s32.totalorder %s37, 0
      %p329 = por %p327, %p328
      %p330 = scmp.ne.s32.totalorder %s318, %s319
      %p331 = scmp.eq.s32.totalorder %s38, 1
      %p332 = por %p330, %p331
      %p334 = scmp.ne.s32.totalorder %s319, %s333
      %p335 = scmp.eq.s32.totalorder %s38, 0
      %p336 = por %p334, %p335
      %s338 = sadd.s32 %s337, 1
      %p341 = scmp.eq.s32.totalorder %s32, 1
      %p342 = scmp.ne.s32.totalorder %s337, %s339
      %p343 = scmp.eq.s32.totalorder %s32, 0
      %p344 = por %p342, %p343
      %p345 = scmp.ne.s32.totalorder %s337, %s339
      %p346 = scmp.eq.s32.totalorder %s37, 1
      %p347 = por %p345, %p346
      %p348 = scmp.ne.s32.totalorder %s339, %s340
      %p349 = scmp.eq.s32.totalorder %s37, 0
      %p350 = por %p348, %p349
      %p351 = scmp.ne.s32.totalorder %s339, %s340
      %p352 = scmp.eq.s32.totalorder %s38, 1
      %p353 = por %p351, %p352
      %p355 = scmp.ne.s32.totalorder %s340, %s354
      %p356 = scmp.eq.s32.totalorder %s38, 0
      %p357 = por %p355, %p356
      %s359 = sadd.s32 %s358, 1
      %p362 = scmp.eq.s32.totalorder %s32, 1
      %p363 = scmp.ne.s32.totalorder %s358, %s360
      %p364 = scmp.eq.s32.totalorder %s32, 0
      %p365 = por %p363, %p364
      %p366 = scmp.ne.s32.totalorder %s358, %s360
      %p367 = scmp.eq.s32.totalorder %s37, 1
      %p368 = por %p366, %p367
      %p369 = scmp.ne.s32.totalorder %s360, %s361
      %p370 = scmp.eq.s32.totalorder %s37, 0
      %p371 = por %p369, %p370
      %p372 = scmp.ne.s32.totalorder %s360, %s361
      %p373 = scmp.eq.s32.totalorder %s38, 1
      %p374 = por %p372, %p373
      %p376 = scmp.ne.s32.totalorder %s361, %s375
      %p377 = scmp.eq.s32.totalorder %s38, 0
      %p378 = por %p376, %p377
      %s380 = sadd.s32 %s379, 1
      %p383 = scmp.eq.s32.totalorder %s32, 1
      %p384 = scmp.ne.s32.totalorder %s379, %s381
      %p385 = scmp.eq.s32.totalorder %s32, 0
      %p386 = por %p384, %p385
      %p387 = scmp.ne.s32.totalorder %s379, %s381
      %p388 = scmp.eq.s32.totalorder %s37, 1
      %p389 = por %p387, %p388
      %p390 = scmp.ne.s32.totalorder %s381, %s382
      %p391 = scmp.eq.s32.totalorder %s37, 0
      %p392 = por %p390, %p391
      %p393 = scmp.ne.s32.totalorder %s381, %s382
      %p394 = scmp.eq.s32.totalorder %s38, 1
      %p395 = por %p393, %p394
      %p397 = scmp.ne.s32.totalorder %s382, %s396
      %p398 = scmp.eq.s32.totalorder %s38, 0
      %p399 = por %p397, %p398
      %s401 = sadd.s32 %s400, 1
      %p404 = scmp.eq.s32.totalorder %s32, 1
      %p405 = scmp.ne.s32.totalorder %s400, %s402
      %p406 = scmp.eq.s32.totalorder %s32, 0
      %p407 = por %p405, %p406
      %p408 = scmp.ne.s32.totalorder %s400, %s402
      %p409 = scmp.eq.s32.totalorder %s37, 1
      %p410 = por %p408, %p409
      %p411 = scmp.ne.s32.totalorder %s402, %s403
      %p412 = scmp.eq.s32.totalorder %s37, 0
      %p413 = por %p411, %p412
      %p414 = scmp.ne.s32.totalorder %s402, %s403
      %p415 = scmp.eq.s32.totalorder %s38, 1
      %p416 = por %p414, %p415
      %p418 = scmp.ne.s32.totalorder %s403, %s417
      %p419 = scmp.eq.s32.totalorder %s38, 0
      %p420 = por %p418, %p419
      %s421 = ssub.s32 %s39, %s51
      %p422 = scmp.eq.s32.totalorder %s421, 0
      %s424 = sadd.s32 %s423, 1
      %s425 = scalar_select %p422, %s423, %s424
      %p428 = pneg %p422
      %p429 = scmp.eq.s32.totalorder %s32, 1
      %p430 = por %p428, %p429
      %p431 = scmp.ne.s32.totalorder %s423, %s426
      %p432 = scmp.eq.s32.totalorder %s32, 0
      %p433 = por %p431, %p432
      %p434 = scmp.ne.s32.totalorder %s423, %s426
      %p435 = scmp.eq.s32.totalorder %s37, 1
      %p436 = por %p434, %p435
      %p437 = scmp.ne.s32.totalorder %s426, %s427
      %p438 = scmp.eq.s32.totalorder %s37, 0
      %p439 = por %p437, %p438
      %p440 = scmp.ne.s32.totalorder %s426, %s427
      %p441 = scmp.eq.s32.totalorder %s38, 1
      %p442 = por %p440, %p441
      %p444 = scmp.ne.s32.totalorder %s427, %s443
      %p445 = scmp.eq.s32.totalorder %s38, 0
      %p446 = por %p444, %p445
      %s447 = ssub.s32 %s39, %s51
      %p448 = scmp.eq.s32.totalorder %s447, 0
      %s450 = sadd.s32 %s449, 1
      %s451 = scalar_select %p448, %s449, %s450
      %p454 = pneg %p448
      %p455 = scmp.eq.s32.totalorder %s32, 1
      %p456 = por %p454, %p455
      %p457 = scmp.ne.s32.totalorder %s449, %s452
      %p458 = scmp.eq.s32.totalorder %s32, 0
      %p459 = por %p457, %p458
      %p460 = scmp.ne.s32.totalorder %s449, %s452
      %p461 = scmp.eq.s32.totalorder %s37, 1
      %p462 = por %p460, %p461
      %p463 = scmp.ne.s32.totalorder %s452, %s453
      %p464 = scmp.eq.s32.totalorder %s37, 0
      %p465 = por %p463, %p464
      %p466 = scmp.ne.s32.totalorder %s452, %s453
      %p467 = scmp.eq.s32.totalorder %s38, 1
      %p468 = por %p466, %p467
      %p470 = scmp.ne.s32.totalorder %s453, %s469
      %p471 = scmp.eq.s32.totalorder %s38, 0
      %p472 = por %p470, %p471
      %p473 = scmp.le.s32.totalorder 1, %s32
      %p474 = scmp.lt.s32.totalorder %s32, 3
      %p475 = pnand %p473, %p474
      %p476 = pneg %p475
      // Predicated region
      $region9: #{tpu_custom_call.1} parent=5 // pred_check
        _
      $region10: #{tpu_custom_call.1} parent=5 // pred_check_branch
        %478 = sbr.rel (%p475) target = $region12
      $region11: #{tpu_custom_call.1} parent=5 // pred_region
        %s479 = ssub.s32 %s32, 1
        // Predicated region
        $region13: #{tpu_custom_call.1} parent=11 // pred_check
          %p480 = pneg %p98
        $region14: #{tpu_custom_call.1} parent=11 // pred_check_branch
          %482 = sbr.rel (%p480) target = $region16
        $region15: #{tpu_custom_call.1} parent=11 // pred_region
          %s483 = smul.u32 2, %s41
          %p484 = scmp.lt.s32.totalorder %s483, 1
          %s485 = scalar_select %p484, %s483, 1
          %s486 = smul.addr %s485, 2
          %s487 = scalar_lea.vmem %s1, %s486
          %s488 = smul.u32 2, %s41
        $region16: #{tpu_custom_call.1} parent=11 // pred_fallthru
          _
        // Predicated region
        $region17: #{tpu_custom_call.1} parent=11 // pred_check
          %p489 = pneg %p119
        $region18: #{tpu_custom_call.1} parent=11 // pred_check_branch
          %491 = sbr.rel (%p489) target = $region20
        $region19: #{tpu_custom_call.1} parent=11 // pred_region
          _
        $region20: #{tpu_custom_call.1} parent=11 // pred_fallthru
          _
        // Predicated region
        $region21: #{tpu_custom_call.1} parent=11 // pred_check
          %p492 = pneg %p140
        $region22: #{tpu_custom_call.1} parent=11 // pred_check_branch
          %494 = sbr.rel (%p492) target = $region24
        $region23: #{tpu_custom_call.1} parent=11 // pred_region
          _
        $region24: #{tpu_custom_call.1} parent=11 // pred_fallthru
          _
        // Predicated region
        $region25: #{tpu_custom_call.1} parent=11 // pred_check
          %p495 = pneg %p161
        $region26: #{tpu_custom_call.1} parent=11 // pred_check_branch
          %497 = sbr.rel (%p495) target = $region28
        $region27: #{tpu_custom_call.1} parent=11 // pred_region
          %499 = vsyncadd [#allocation7], 0
          %s500 = sshll.u32 %s4, 4
          %s501 = int_to_ptr.hbm [resolvable:$true] %s500
          %s502 = sshll.u32 [#allocation6], 4
          %s503 = int_to_ptr.vmem [resolvable:$true] %s502
          %508 = dma.hbm_to_vmem [thread:$0]  %s501, 256, %s503, [#allocation7], 64, 64, 4
        $region28: #{tpu_custom_call.1} parent=11 // pred_fallthru
          _
        // Predicated region
        $region29: #{tpu_custom_call.1} parent=11 // pred_check
          %p509 = pneg %p182
        $region30: #{tpu_custom_call.1} parent=11 // pred_check_branch
          %511 = sbr.rel (%p509) target = $region32
        $region31: #{tpu_custom_call.1} parent=11 // pred_region
          _
        $region32: #{tpu_custom_call.1} parent=11 // pred_fallthru
          _
        // Predicated region
        $region33: #{tpu_custom_call.1} parent=11 // pred_check
          %p512 = pneg %p203
        $region34: #{tpu_custom_call.1} parent=11 // pred_check_branch
          %514 = sbr.rel (%p512) target = $region36
        $region35: #{tpu_custom_call.1} parent=11 // pred_region
          %516 = vsyncadd [#allocation7], 0
          %s517 = sshll.u32 %s6, 4
          %s518 = int_to_ptr.hbm [resolvable:$true] %s517
          %s519 = sshll.u32 [#allocation8], 4
          %s520 = int_to_ptr.vmem [resolvable:$true] %s519
          %525 = dma.hbm_to_vmem [thread:$0]  %s518, 256, %s520, [#allocation7], 64, 64, 4
        $region36: #{tpu_custom_call.1} parent=11 // pred_fallthru
          _
        // Predicated region
        $region37: #{tpu_custom_call.1} parent=11 // pred_check
          %p526 = pneg %p224
        $region38: #{tpu_custom_call.1} parent=11 // pred_check_branch
          %528 = sbr.rel (%p526) target = $region40
        $region39: #{tpu_custom_call.1} parent=11 // pred_region
          %530 = vsyncadd [#allocation10], 0
          %s531 = sshll.u32 %s7, 4
          %s532 = int_to_ptr.hbm [resolvable:$true] %s531
          %s533 = sshll.u32 [#allocation9], 4
          %s534 = int_to_ptr.vmem [resolvable:$true] %s533
          %539 = dma.hbm_to_vmem [thread:$0]  %s532, 256, %s534, [#allocation10], 64, 64, 4
        $region40: #{tpu_custom_call.1} parent=11 // pred_fallthru
          _
        // Predicated region
        $region41: #{tpu_custom_call.1} parent=11 // pred_check
          %p540 = pneg %p245
        $region42: #{tpu_custom_call.1} parent=11 // pred_check_branch
          %542 = sbr.rel (%p540) target = $region44
        $region43: #{tpu_custom_call.1} parent=11 // pred_region
          _
        $region44: #{tpu_custom_call.1} parent=11 // pred_fallthru
          _
        // Predicated region
        $region45: #{tpu_custom_call.1} parent=11 // pred_check
          %p543 = pneg %p266
        $region46: #{tpu_custom_call.1} parent=11 // pred_check_branch
          %545 = sbr.rel (%p543) target = $region48
        $region47: #{tpu_custom_call.1} parent=11 // pred_region
          _
        $region48: #{tpu_custom_call.1} parent=11 // pred_fallthru
          _
        // Predicated region
        $region49: #{tpu_custom_call.1} parent=11 // pred_check
          %p546 = pneg %p287
        $region50: #{tpu_custom_call.1} parent=11 // pred_check_branch
          %548 = sbr.rel (%p546) target = $region52
        $region51: #{tpu_custom_call.1} parent=11 // pred_region
          _
        $region52: #{tpu_custom_call.1} parent=11 // pred_fallthru
          _
        // Predicated region
        $region53: #{tpu_custom_call.1} parent=11 // pred_check
          %p549 = pneg %p308
        $region54: #{tpu_custom_call.1} parent=11 // pred_check_branch
          %551 = sbr.rel (%p549) target = $region56
        $region55: #{tpu_custom_call.1} parent=11 // pred_region
          _
        $region56: #{tpu_custom_call.1} parent=11 // pred_fallthru
          _
        // Predicated region
        $region57: #{tpu_custom_call.1} parent=11 // pred_check
          %p552 = pneg %p329
        $region58: #{tpu_custom_call.1} parent=11 // pred_check_branch
          %554 = sbr.rel (%p552) target = $region60
        $region59: #{tpu_custom_call.1} parent=11 // pred_region
          _
        $region60: #{tpu_custom_call.1} parent=11 // pred_fallthru
          _
        // Predicated region
        $region61: #{tpu_custom_call.1} parent=11 // pred_check
          %p555 = pneg %p350
        $region62: #{tpu_custom_call.1} parent=11 // pred_check_branch
          %557 = sbr.rel (%p555) target = $region64
        $region63: #{tpu_custom_call.1} parent=11 // pred_region
          _
        $region64: #{tpu_custom_call.1} parent=11 // pred_fallthru
          _
        // Predicated region
        $region65: #{tpu_custom_call.1} parent=11 // pred_check
          %p558 = pneg %p371
        $region66: #{tpu_custom_call.1} parent=11 // pred_check_branch
          %560 = sbr.rel (%p558) target = $region68
        $region67: #{tpu_custom_call.1} parent=11 // pred_region
          _
        $region68: #{tpu_custom_call.1} parent=11 // pred_fallthru
          _
        // Predicated region
        $region69: #{tpu_custom_call.1} parent=11 // pred_check
          %p561 = pneg %p392
        $region70: #{tpu_custom_call.1} parent=11 // pred_check_branch
          %563 = sbr.rel (%p561) target = $region72
        $region71: #{tpu_custom_call.1} parent=11 // pred_region
          _
        $region72: #{tpu_custom_call.1} parent=11 // pred_fallthru
          _
        // Predicated region
        $region73: #{tpu_custom_call.1} parent=11 // pred_check
          %p564 = pneg %p413
        $region74: #{tpu_custom_call.1} parent=11 // pred_check_branch
          %566 = sbr.rel (%p564) target = $region76
        $region75: #{tpu_custom_call.1} parent=11 // pred_region
          _
        $region76: #{tpu_custom_call.1} parent=11 // pred_fallthru
          _
      $region12: #{tpu_custom_call.1} parent=5 // pred_fallthru
        _
      %p567 = scmp.lt.s32.totalorder %s32, 2
      // Predicated region
      $region77: #{tpu_custom_call.1} parent=5 // pred_check
        %p568 = pneg %p567
      $region78: #{tpu_custom_call.1} parent=5 // pred_check_branch
        %570 = sbr.rel (%p568) target = $region80
      $region79: #{tpu_custom_call.1} parent=5 // pred_region
        // Predicated region
        $region81: #{tpu_custom_call.1} parent=79 // pred_check
          %p571 = pneg %p66
        $region82: #{tpu_custom_call.1} parent=79 // pred_check_branch
          %573 = sbr.rel (%p571) target = $region84
        $region83: #{tpu_custom_call.1} parent=79 // pred_region
          #allocation15 [shape = 'u32[6]{0}', space=smem, size = 0x18, scoped, tag = 'DMA stride descriptor']
          %s574 = sand.u32 %s56, 1
          %s575 = scalar_lea.sflag [#allocation4], %s574
          %s576 = sand.u32 %s56, 1
          %s577 = smul.addr %s576, 16
          %s578 = scalar_lea.vmem [#allocation3], %s577
          %s579 = smul.u32 2, %s39
          %s580 = smul.u32 2, %s40
          %582 = vsyncadd %s575, 0
          %s583 = smul.addr %s579, 4
          %s584 = sadd.s32 %s580, %s583
          %s585 = smul.addr %s584, 4
          %s586 = scalar_lea.hbm %s0, %s585
          %s588 = sshll.u32 1, 14
          %s589 = sxor.u32 4294967295, %s588
          %s591 = sld [smem:[#allocation0]]
          %s592 = sadd.s32 2, %s591
          %s594 = sshll.u32 7, 26
          %s595 = sxor.u32 4294967295, %s594
          %s596 = sand.u32 0, %s595
          %s597 = sshll.u32 %s592, 26
          %s598 = sor.u32 %s596, %s597
          %s599 = sshll.u32 %s586, 4
          %s600 = int_to_ptr.hbm [resolvable:$true] %s599
          %s601 = sshll.u32 %s578, 4
          %s602 = int_to_ptr.vmem [resolvable:$true] %s601
          %608 = sst [smem:[#allocation15]] 256
          %s609 = scalar_lea.smem [#allocation15], 1
          %610 = sst [smem:[%s609]] 128
          %s611 = scalar_lea.smem [#allocation15], 2
          %612 = sst [smem:[%s611]] 2
          %s613 = scalar_lea.smem [#allocation15], 3
          %614 = sst [smem:[%s613]] 64
          %s615 = scalar_lea.smem [#allocation15], 4
          %616 = sst [smem:[%s615]] 64
          %s617 = scalar_lea.smem [#allocation15], 5
          %618 = sst [smem:[%s617]] 4
          %620 = dma.general %s600, 256, %s602, %s575, [#allocation14], [#allocation15], %s598, 0
        $region84: #{tpu_custom_call.1} parent=79 // pred_fallthru
          _
      $region80: #{tpu_custom_call.1} parent=5 // pred_fallthru
        _
      %p621 = scmp.le.s32.totalorder 1, %s32
      %p622 = scmp.lt.s32.totalorder %s32, 3
      %p623 = pnand %p621, %p622
      %p624 = pneg %p623
      // Predicated region
      $region85: #{tpu_custom_call.1} parent=5 // pred_check
        _
      $region86: #{tpu_custom_call.1} parent=5 // pred_check_branch
        %626 = sbr.rel (%p623) target = $region88
      $region87: #{tpu_custom_call.1} parent=5 // pred_region
        %s627 = ssub.s32 %s32, 1
        %s628 = sand.u32 %s59, 1
        %s629 = scalar_lea.sflag [#allocation4], %s628
        %s630 = sand.u32 %s59, 1
        %s631 = smul.addr %s630, 16
        %s632 = scalar_lea.vmem [#allocation3], %s631
        // Predicated region
        $region89: #{tpu_custom_call.1} parent=87 // pred_check
          %p633 = pneg %p72
        $region90: #{tpu_custom_call.1} parent=87 // pred_check_branch
          %635 = sbr.rel (%p633) target = $region92
        $region91: #{tpu_custom_call.1} parent=87 // pred_region
          %637 = dma.done %s629, 256
        $region92: #{tpu_custom_call.1} parent=87 // pred_fallthru
          _
        // Predicated region
        $region93: #{tpu_custom_call.1} parent=87 // pred_check
          %p638 = pneg %p161
        $region94: #{tpu_custom_call.1} parent=87 // pred_check_branch
          %640 = sbr.rel (%p638) target = $region96
        $region95: #{tpu_custom_call.1} parent=87 // pred_region
          %642 = dma.done [#allocation7], 256
        $region96: #{tpu_custom_call.1} parent=87 // pred_fallthru
          _
        // Predicated region
        $region97: #{tpu_custom_call.1} parent=87 // pred_check
          %p643 = pneg %p203
        $region98: #{tpu_custom_call.1} parent=87 // pred_check_branch
          %645 = sbr.rel (%p643) target = $region100
        $region99: #{tpu_custom_call.1} parent=87 // pred_region
          %647 = dma.done [#allocation7], 256
        $region100: #{tpu_custom_call.1} parent=87 // pred_fallthru
          _
        // Predicated region
        $region101: #{tpu_custom_call.1} parent=87 // pred_check
          %p648 = pneg %p224
        $region102: #{tpu_custom_call.1} parent=87 // pred_check_branch
          %650 = sbr.rel (%p648) target = $region104
        $region103: #{tpu_custom_call.1} parent=87 // pred_region
          %652 = dma.done [#allocation10], 256
        $region104: #{tpu_custom_call.1} parent=87 // pred_fallthru
          _
        %s653 = sand.u32 %s59, 1
        %s654 = scalar_lea.sflag [#allocation4], %s653
        %s655 = sand.u32 %s59, 1
        %s656 = smul.addr %s655, 16
        %s657 = scalar_lea.vmem [#allocation3], %s656
        %p658 = pneg %p72
        %p659 = pneg %p69
        %s660 = smul.u32 2, %s41
        %p661 = scmp.lt.s32.totalorder %s660, 1
        %s662 = scalar_select %p661, %s660, 1
        %s663 = smul.addr %s662, 2
        %s664 = scalar_lea.vmem %s1, %s663
        %p665 = pneg %p98
        %p666 = pneg %p95
        %p667 = pneg %p119
        %p668 = pneg %p116
        %p669 = pneg %p140
        %p670 = pneg %p137
        %p671 = pneg %p161
        %p672 = pneg %p158
        %p673 = pneg %p182
        %p674 = pneg %p179
        %p675 = pneg %p203
        %p676 = pneg %p200
        %p677 = pneg %p224
        %p678 = pneg %p221
        %p679 = pneg %p245
        %p680 = pneg %p242
        %p681 = pneg %p266
        %p682 = pneg %p263
        %p683 = pneg %p287
        %p684 = pneg %p284
        %p685 = pneg %p308
        %p686 = pneg %p305
        %p687 = pneg %p329
        %p688 = pneg %p326
        %p689 = pneg %p350
        %p690 = pneg %p347
        %p691 = pneg %p371
        %p692 = pneg %p368
        %p693 = pneg %p392
        %p694 = pneg %p389
        %p695 = pneg %p413
        %p696 = pneg %p410
        %p697 = pneg %p439
        %p698 = pneg %p436
        %p699 = pneg %p465
        %p700 = pneg %p462
        %s701 = smul.u32 2, %s41
        %s702 = smul.u32 2, %s42
        %s703 = smul.u32 2, %s41
        %p704 = scmp.lt.s32.totalorder %s703, 1
        %s705 = scalar_select %p704, %s703, 1
        %s706 = smul.addr %s705, 2
        %s707 = scalar_lea.vmem %s1, %s706
        %s708 = smul.u32 2, %s41
        %p710 = scmp.eq.s32.totalorder %s42, 0
        // Predicated region
        $region105: #{tpu_custom_call.1} parent=87 // pred_check
          %p711 = pneg %p710
        $region106: #{tpu_custom_call.1} parent=87 // pred_check_branch
          %713 = sbr.rel (%p711) target = $region108
        $region107: #{tpu_custom_call.1} parent=87 // pred_region
          %vm714 = vcmask 254976
          %715 = vst.msk [vmem:[#allocation2] sm:$0x3] %vm714, 0.0
        $region108: #{tpu_custom_call.1} parent=87 // pred_fallthru
          _
        %v716 = vld [vmem:[#allocation2] sm:$0x3]
        %v717 = vld [vmem:[%s632] sm:$0xf]
        %v718 = vld [vmem:[%s632 + $0x4] sm:$0xf]
        %v719 = vld [vmem:[%s632 + $0x8] sm:$0xf]
        %v720 = vld [vmem:[%s632 + $0xc] sm:$0xf]
        %v721 = vunpack.c.l.bf16 %v717
        %v722 = vunpack.c.l.bf16 %v718
        %v723 = vunpack.c.l.bf16 %v719
        %v724 = vunpack.c.l.bf16 %v720
        %vm725 = vcmask 261120
        %v726 = vsel %vm725, %v721, 0.0
        %v727 = vsel %vm725, %v722, 0.0
        %v728 = vadd.f32 %v726, %v727
        %v729 = vrot.slane %v728, 4
        %v730 = vadd.f32 %v728, %v729
        %v731 = vrot.slane %v730, 2
        %v732 = vadd.f32 %v730, %v731
        %v733 = vrot.slane %v732, 1
        %v734 = vadd.f32 %v732, %v733
        %v735 = vsel %vm725, %v723, 0.0
        %v736 = vsel %vm725, %v724, 0.0
        %v737 = vadd.f32 %v735, %v736
        %v738 = vrot.slane %v737, 4
        %v739 = vadd.f32 %v737, %v738
        %v740 = vrot.slane %v739, 2
        %v741 = vadd.f32 %v739, %v740
        %v742 = vrot.slane %v741, 1
        %v743 = vadd.f32 %v741, %v742
        %vm746 = vcmask 1041409
        %v747 = vsel %vm746, %v743, %v734
        %v749 = vadd.f32 %v716, %v747
        %vm750 = vcmask 254976
        %751 = vst.msk [vmem:[#allocation2] sm:$0x3] %vm750, %v749
        %p752 = scmp.eq.s32.totalorder %s42, 1
        // Predicated region
        $region109: #{tpu_custom_call.1} parent=87 // pred_check
          %p753 = pneg %p752
        $region110: #{tpu_custom_call.1} parent=87 // pred_check_branch
          %755 = sbr.rel (%p753) target = $region112
        $region111: #{tpu_custom_call.1} parent=87 // pred_region
          %v756 = vld [vmem:[#allocation2] sm:$0x3]
          %v757 = vmul.f32 %v756, 0.03125
          %v758 = vld [vmem:[%s707] sm:$0x3]
          %v759 = vld [vmem:[%s707 + $0x2] sm:$0x3]
          %v760 = vunpack.c.l.bf16 %v758
          %v761 = vunpack.c.l.bf16 %v759
          %vm762 = vcmask 257024
          %v763 = vsel %vm762, %v760, 0.0
          %v764 = vrot.slane %v763, 4
          %v765 = vadd.f32 %v763, %v764
          %v766 = vrot.slane %v765, 2
          %v767 = vadd.f32 %v765, %v766
          %v768 = vrot.slane %v767, 1
          %v769 = vadd.f32 %v767, %v768
          %v770 = vsel %vm762, %v761, 0.0
          %v771 = vrot.slane %v770, 4
          %v772 = vadd.f32 %v770, %v771
          %v773 = vrot.slane %v772, 2
          %v774 = vadd.f32 %v772, %v773
          %v775 = vrot.slane %v774, 1
          %v776 = vadd.f32 %v774, %v775
          %v777 = vmul.f32 %v769, 0.25
          %v778 = vmul.f32 %v776, 0.25
          %v779 = vld [vmem:[%s2] sm:$0xf]
          %v780 = vld [vmem:[%s2 + $0x4] sm:$0xf]
          %v781 = vld [vmem:[%s2 + $0x8] sm:$0xf]
          %v782 = vld [vmem:[%s2 + $0xc] sm:$0xf]
          %v783 = vld [vmem:[%s3] sm:$0x1]
          %v784 = vld [vmem:[#allocation6] sm:$0xf]
          %v785 = vld [vmem:[#allocation6 + $0x4] sm:$0xf]
          %v786 = vld [vmem:[#allocation6 + $0x8] sm:$0xf]
          %v787 = vld [vmem:[#allocation6 + $0xc] sm:$0xf]
          %v788 = vld [vmem:[%s5] sm:$0x1]
          %v789 = vld [vmem:[#allocation8] sm:$0xf]
          %v790 = vld [vmem:[#allocation8 + $0x4] sm:$0xf]
          %v791 = vld [vmem:[#allocation8 + $0x8] sm:$0xf]
          %v792 = vld [vmem:[#allocation8 + $0xc] sm:$0xf]
          %v793 = vld [vmem:[#allocation9] sm:$0xf]
          %v794 = vld [vmem:[#allocation9 + $0x4] sm:$0xf]
          %v795 = vld [vmem:[#allocation9 + $0x8] sm:$0xf]
          %v796 = vld [vmem:[#allocation9 + $0xc] sm:$0xf]
          %v797 = vld [vmem:[%s8] sm:$0x1]
          %v798 = vld [vmem:[%s9] sm:$0x1]
          %v799 = vld [vmem:[%s10] sm:$0x1]
          %v800 = vld [vmem:[%s11] sm:$0xf]
          %v801 = vld [vmem:[%s11 + $0x4] sm:$0xf]
          %v802 = vld [vmem:[%s11 + $0x8] sm:$0xf]
          %v803 = vld [vmem:[%s11 + $0xc] sm:$0xf]
          %v804 = vld [vmem:[%s12] sm:$0x1]
          %v805 = vld [vmem:[%s13] sm:$0x1]
          %v806 = vld [vmem:[%s14] sm:$0x1]
          %v807 = vld [vmem:[%s15] sm:$0xf]
          %v808 = vld [vmem:[%s15 + $0x4] sm:$0xf]
          %v809 = vld [vmem:[%s16] sm:$0x1]
          %v810 = vpack.c.bf16 %v757, %v757
          %v812 = vperm.slane %v783, 0
          %v818 = vunpack.c.l.b16 %v779
          %v819 = vunpack.c.l.b16 %v780
          %v820 = vunpack.c.l.b16 %v781
          %v821 = vunpack.c.l.b16 %v782
          %v822 = vpack.c.b16 %v819, %v818
          %v823 = vpack.c.b16 %v821, %v820
          %v827 = vsel %vm725, %v810, 0
          %829 = vmatpush.bf16.msra.mxu0 0
          %830 = vmatpush.bf16.msra.mxu0 0
          %831 = vmatpush.bf16.msra.mxu0 0
          %832 = vmatpush.bf16.msra.mxu0 0
          %833 = vmatpush.bf16.msra.mxu0 0
          %834 = vmatpush.bf16.msra.mxu0 0
          %835 = vmatpush.bf16.msra.mxu0 %v823
          %836 = vmatpush.bf16.msra.mxu0 %v822
          %837 = vmatmul.bf16.gmra.mxu0 %v827
          %v838 = vpop.f32.mrf.mxu0
          %v839 = vadd.f32 %v812, %v838
          %v840 = vpop.f32.mrf.mxu0
          %841 = vdwg.mxu0
          %v842 = vpack.c.bf16 %v777, %v777
          %v843 = vpack.c.bf16 %v778, %v778
          %v845 = vperm.slane %v788, 0
          %v849 = vunpack.c.l.b16 %v842
          %v850 = vunpack.c.l.b16 %v843
          %v851 = vsel %vm746, %v850, %v849
          %v852 = vpack.c.b16 %v851, %v851
          %v857 = vunpack.c.l.b16 %v784
          %v858 = vunpack.c.l.b16 %v785
          %v859 = vunpack.c.l.b16 %v786
          %v860 = vunpack.c.l.b16 %v787
          %v861 = vpack.c.b16 %v858, %v857
          %v862 = vpack.c.b16 %v860, %v859
          %v866 = vsel %vm725, %v852, 0
          %868 = vmatpush.bf16.msra.mxu0 0
          %869 = vmatpush.bf16.msra.mxu0 0
          %870 = vmatpush.bf16.msra.mxu0 0
          %871 = vmatpush.bf16.msra.mxu0 0
          %872 = vmatpush.bf16.msra.mxu0 0
          %873 = vmatpush.bf16.msra.mxu0 0
          %874 = vmatpush.bf16.msra.mxu0 %v862
          %875 = vmatpush.bf16.msra.mxu0 %v861
          %876 = vmatmul.bf16.gmra.mxu0 %v866
          %v877 = vpop.f32.mrf.mxu0
          %v878 = vadd.f32 %v845, %v877
          %v879 = vpop.f32.mrf.mxu0
          %880 = vdwg.mxu0
          %v881 = vpack.c.bf16 %v839, %v839
          %v882 = vpack.c.bf16 %v878, %v878
          %v887 = vunpack.c.l.b16 %v793
          %v888 = vunpack.c.l.b16 %v794
          %v889 = vunpack.c.l.b16 %v795
          %v890 = vunpack.c.l.b16 %v796
          %v891 = vpack.c.b16 %v888, %v887
          %v892 = vpack.c.b16 %v890, %v889
          %v896 = vsel %vm725, %v882, 0
          %898 = vmatpush.bf16.msra.mxu0 0
          %899 = vmatpush.bf16.msra.mxu0 0
          %900 = vmatpush.bf16.msra.mxu0 0
          %901 = vmatpush.bf16.msra.mxu0 0
          %902 = vmatpush.bf16.msra.mxu0 0
          %903 = vmatpush.bf16.msra.mxu0 0
          %904 = vmatpush.bf16.msra.mxu0 %v892
          %905 = vmatpush.bf16.msra.mxu0 %v891
          %906 = vmatmul.bf16.gmra.mxu0 %v896
          %v907 = vpop.f32.mrf.mxu0
          %v908 = vadd.f32 0.0, %v907
          %v909 = vpop.f32.mrf.mxu0
          %910 = vdwg.mxu0
          %v915 = vunpack.c.l.b16 %v789
          %v916 = vunpack.c.l.b16 %v790
          %v917 = vunpack.c.l.b16 %v791
          %v918 = vunpack.c.l.b16 %v792
          %v919 = vpack.c.b16 %v916, %v915
          %v920 = vpack.c.b16 %v918, %v917
          %v924 = vsel %vm725, %v881, 0
          %926 = vmatpush.bf16.msra.mxu0 0
          %927 = vmatpush.bf16.msra.mxu0 0
          %928 = vmatpush.bf16.msra.mxu0 0
          %929 = vmatpush.bf16.msra.mxu0 0
          %930 = vmatpush.bf16.msra.mxu0 0
          %931 = vmatpush.bf16.msra.mxu0 0
          %932 = vmatpush.bf16.msra.mxu0 %v920
          %933 = vmatpush.bf16.msra.mxu0 %v919
          %934 = vmatmul.bf16.gmra.mxu0 %v924
          %v935 = vpop.f32.mrf.mxu0
          %v936 = vadd.f32 %v908, %v935
          %v937 = vpop.f32.mrf.mxu0
          %938 = vdwg.mxu0
          %v940 = vperm.slane %v797, 0
          %v942 = vadd.f32 %v936, %v940
          %v943 = vsel %vm750, %v942, 0.0
          %944 = vadd.xlane.f32.xlu0 %v943
          %v945 = vpop.xlane.xlu0 %944
          %v946 = vrcp.pop 32.0
          %v947 = vmul.f32 32.0, %v946
          %v948 = vsub.f32 1.0, %v947
          %v949 = vmul.f32 %v946, %v948
          %v950 = vadd.f32 %v946, %v949
          %vm951 = vweird.f32 %v946
          %v952 = vsel %vm951, %v946, %v950
          %v953 = vmul.f32 %v945, %v952
          %v954 = vsub.f32 %v942, %v953
          %v955 = vmul.f32 %v954, %v954
          %v956 = vsel %vm750, %v955, 0.0
          %957 = vadd.xlane.f32.xlu0 %v956
          %v958 = vpop.xlane.xlu0 %957
          %v959 = vmul.f32 %v958, %v952
          %v960 = vadd.f32 %v959, 1e-05
          %v961 = vrsqrt.pop %v960
          %v962 = vmul.f32 %v961, %v960
          %v963 = vmul.f32 %v962, %v961
          %v964 = vmul.f32 0.5, %v963
          %v965 = vsub.f32 1.5, %v964
          %v966 = vmul.f32 %v961, %v965
          %vm967 = vweird.f32 %v960
          %vm968 = vweird.f32 %v961
          %vm969 = vmor %vm967, %vm968
          %v970 = vsel %vm969, %v961, %v966
          %v971 = vmul.f32 %v954, %v970
          %v973 = vperm.slane %v798, 0
          %v975 = vmul.f32 %v971, %v973
          %v977 = vperm.slane %v799, 0
          %v979 = vadd.f32 %v975, %v977
          %v980 = vmul.f32 %v979, 0.5
          %v981 = vmul.f32 %v979, 0.70710677
          %v982 = vmul.f32 %v981, %v981
          %v983 = vmin.f32 16.0, %v982
          %v984 = vmul.f32 %v983, 2.1237322e-06
          %v985 = vadd.f32 %v984, 0.00028619796
          %v986 = vmul.f32 %v983, %v985
          %v987 = vadd.f32 %v986, 0.0036580483
          %v988 = vmul.f32 %v983, %v987
          %v989 = vadd.f32 %v988, 0.05243302
          %v990 = vmul.f32 %v983, %v989
          %v991 = vadd.f32 %v990, 0.18741608
          %v992 = vmul.f32 %v983, %v991
          %v993 = vadd.f32 %v992, 1.1283791
          %v994 = vmul.f32 %v981, %v993
          %v995 = vmul.f32 %v983, 3.8918573e-05
          %v996 = vadd.f32 %v995, 0.001143296
          %v997 = vmul.f32 %v983, %v996
          %v998 = vadd.f32 %v997, 0.014752088
          %v999 = vmul.f32 %v983, %v998
          %v1000 = vadd.f32 %v999, 0.112945676
          %v1001 = vmul.f32 %v983, %v1000
          %v1002 = vadd.f32 %v1001, 0.4994258
          %v1003 = vmul.f32 %v983, %v1002
          %v1004 = vadd.f32 %v1003, 1.0
          %v1005 = vrcp.pop %v1004
          %v1006 = vmul.f32 %v1004, %v1005
          %v1007 = vsub.f32 1.0, %v1006
          %v1008 = vmul.f32 %v1005, %v1007
          %v1009 = vadd.f32 %v1005, %v1008
          %vm1010 = vweird.f32 %v1004
          %vm1011 = vweird.f32 %v1005
          %vm1012 = vmor %vm1010, %vm1011
          %v1013 = vsel %vm1012, %v1005, %v1009
          %v1014 = vand.u32 2147483647, %v1004
          %vm1015 = vcmp.eq.f32.partialorder %v1014, 8.507059e+37
          %v1016 = vand.u32 %v1004, 2147483648
          %v1017 = vor.u32 1.1754944e-38, %v1016
          %v1018 = vsel %vm1015, %v1017, %v1013
          %v1019 = vmul.f32 %v994, %v1018
          %v1020 = vmin.f32 %v1019, 1.0
          %v1021 = vmax.f32 %v1020, -1.0
          %v1022 = vadd.f32 %v1021, 1.0
          %v1023 = vmul.f32 %v980, %v1022
          %v1024 = vpack.c.bf16 %v1023, %v1023
          %v1026 = vperm.slane %v804, 0
          %v1032 = vunpack.c.l.b16 %v800
          %v1033 = vunpack.c.l.b16 %v801
          %v1034 = vunpack.c.l.b16 %v802
          %v1035 = vunpack.c.l.b16 %v803
          %v1036 = vpack.c.b16 %v1033, %v1032
          %v1037 = vpack.c.b16 %v1035, %v1034
          %v1041 = vsel %vm725, %v1024, 0
          %1043 = vmatpush.bf16.msra.mxu0 0
          %1044 = vmatpush.bf16.msra.mxu0 0
          %1045 = vmatpush.bf16.msra.mxu0 0
          %1046 = vmatpush.bf16.msra.mxu0 0
          %1047 = vmatpush.bf16.msra.mxu0 0
          %1048 = vmatpush.bf16.msra.mxu0 0
          %1049 = vmatpush.bf16.msra.mxu0 %v1037
          %1050 = vmatpush.bf16.msra.mxu0 %v1036
          %1051 = vmatmul.bf16.gmra.mxu0 %v1041
          %v1052 = vpop.f32.mrf.mxu0
          %v1053 = vadd.f32 %v1026, %v1052
          %v1054 = vpop.f32.mrf.mxu0
          %1055 = vdwg.mxu0
          %vm1056 = vcmask 123904
          %v1057 = vsel %vm1056, %v1053, 0.0
          %1058 = vadd.xlane.f32.xlu0 %v1057
          %v1059 = vpop.xlane.xlu0 %1058
          %v1060 = vrcp.pop 16.0
          %v1061 = vmul.f32 16.0, %v1060
          %v1062 = vsub.f32 1.0, %v1061
          %v1063 = vmul.f32 %v1060, %v1062
          %v1064 = vadd.f32 %v1060, %v1063
          %vm1065 = vweird.f32 %v1060
          %v1066 = vsel %vm1065, %v1060, %v1064
          %v1067 = vmul.f32 %v1059, %v1066
          %v1068 = vsub.f32 %v1053, %v1067
          %v1069 = vmul.f32 %v1068, %v1068
          %v1070 = vsel %vm1056, %v1069, 0.0
          %1071 = vadd.xlane.f32.xlu0 %v1070
          %v1072 = vpop.xlane.xlu0 %1071
          %v1073 = vmul.f32 %v1072, %v1066
          %v1074 = vadd.f32 %v1073, 1e-05
          %v1075 = vrsqrt.pop %v1074
          %v1076 = vmul.f32 %v1075, %v1074
          %v1077 = vmul.f32 %v1076, %v1075
          %v1078 = vmul.f32 0.5, %v1077
          %v1079 = vsub.f32 1.5, %v1078
          %v1080 = vmul.f32 %v1075, %v1079
          %vm1081 = vweird.f32 %v1074
          %vm1082 = vweird.f32 %v1075
          %vm1083 = vmor %vm1081, %vm1082
          %v1084 = vsel %vm1083, %v1075, %v1080
          %v1085 = vmul.f32 %v1068, %v1084
          %v1087 = vperm.slane %v805, 0
          %v1089 = vmul.f32 %v1085, %v1087
          %v1091 = vperm.slane %v806, 0
          %v1093 = vadd.f32 %v1089, %v1091
          %v1094 = vmul.f32 %v1093, 0.5
          %v1095 = vmul.f32 %v1093, 0.70710677
          %v1096 = vmul.f32 %v1095, %v1095
          %v1097 = vmin.f32 16.0, %v1096
          %v1098 = vmul.f32 %v1097, 2.1237322e-06
          %v1099 = vadd.f32 %v1098, 0.00028619796
          %v1100 = vmul.f32 %v1097, %v1099
          %v1101 = vadd.f32 %v1100, 0.0036580483
          %v1102 = vmul.f32 %v1097, %v1101
          %v1103 = vadd.f32 %v1102, 0.05243302
          %v1104 = vmul.f32 %v1097, %v1103
          %v1105 = vadd.f32 %v1104, 0.18741608
          %v1106 = vmul.f32 %v1097, %v1105
          %v1107 = vadd.f32 %v1106, 1.1283791
          %v1108 = vmul.f32 %v1095, %v1107
          %v1109 = vmul.f32 %v1097, 3.8918573e-05
          %v1110 = vadd.f32 %v1109, 0.001143296
          %v1111 = vmul.f32 %v1097, %v1110
          %v1112 = vadd.f32 %v1111, 0.014752088
          %v1113 = vmul.f32 %v1097, %v1112
          %v1114 = vadd.f32 %v1113, 0.112945676
          %v1115 = vmul.f32 %v1097, %v1114
          %v1116 = vadd.f32 %v1115, 0.4994258
          %v1117 = vmul.f32 %v1097, %v1116
          %v1118 = vadd.f32 %v1117, 1.0
          %v1119 = vrcp.pop %v1118
          %v1120 = vmul.f32 %v1118, %v1119
          %v1121 = vsub.f32 1.0, %v1120
          %v1122 = vmul.f32 %v1119, %v1121
          %v1123 = vadd.f32 %v1119, %v1122
          %vm1124 = vweird.f32 %v1118
          %vm1125 = vweird.f32 %v1119
          %vm1126 = vmor %vm1124, %vm1125
          %v1127 = vsel %vm1126, %v1119, %v1123
          %v1128 = vand.u32 2147483647, %v1118
          %vm1129 = vcmp.eq.f32.partialorder %v1128, 8.507059e+37
          %v1130 = vand.u32 %v1118, 2147483648
          %v1131 = vor.u32 1.1754944e-38, %v1130
          %v1132 = vsel %vm1129, %v1131, %v1127
          %v1133 = vmul.f32 %v1108, %v1132
          %v1134 = vmin.f32 %v1133, 1.0
          %v1135 = vmax.f32 %v1134, -1.0
          %v1136 = vadd.f32 %v1135, 1.0
          %v1137 = vmul.f32 %v1094, %v1136
          %v1138 = vpack.c.bf16 %v1137, %v1137
          %v1140 = vperm.slane %v809, 0
          %v1144 = vunpack.c.l.b16 %v807
          %v1145 = vunpack.c.l.b16 %v808
          %v1146 = vpack.c.b16 %v1145, %v1144
          %vm1148 = vcmask 130048
          %v1150 = vsel %vm1148, %v1138, 0
          %1152 = vmatpush.bf16.msra.mxu0 0
          %1153 = vmatpush.bf16.msra.mxu0 0
          %1154 = vmatpush.bf16.msra.mxu0 0
          %1155 = vmatpush.bf16.msra.mxu0 0
          %1156 = vmatpush.bf16.msra.mxu0 0
          %1157 = vmatpush.bf16.msra.mxu0 0
          %1158 = vmatpush.bf16.msra.mxu0 0
          %1159 = vmatpush.bf16.msra.mxu0 %v1146
          %1160 = vmatmul.bf16.gmra.mxu0 %v1150
          %v1161 = vpop.f32.mrf.mxu0
          %v1162 = vadd.f32 %v1140, %v1161
          %v1163 = vpop.f32.mrf.mxu0
          %1164 = vdwg.mxu0
          %1165 = vst.msk [vmem:[#allocation12] sm:$0x3] %vm750, %v1023
          %vm1166 = vcmask 9216
          %1167 = vst.msk [vmem:[#allocation11] sm:$0x3] %vm1166, %v1162
        $region112: #{tpu_custom_call.1} parent=87 // pred_fallthru
          _
        // Predicated region
        $region113: #{tpu_custom_call.1} parent=87 // pred_check
          %p1168 = pneg %p436
        $region114: #{tpu_custom_call.1} parent=87 // pred_check_branch
          %1170 = sbr.rel (%p1168) target = $region116
        $region115: #{tpu_custom_call.1} parent=87 // pred_region
          %1172 = vsyncadd [#allocation5], 0
          %s1173 = smul.addr %s41, 2
          %s1174 = scalar_lea.hbm %s17, %s1173
          %s1176 = sshll.u32 [#allocation11], 4
          %s1177 = int_to_ptr.vmem [resolvable:$true] %s1176
          %s1178 = sshll.u32 %s1174, 4
          %s1179 = int_to_ptr.hbm [resolvable:$true] %s1178
          %1181 = dma.vmem_to_hbm [thread:$0]  %s1177, 32, %s1179, [#allocation5]
        $region116: #{tpu_custom_call.1} parent=87 // pred_fallthru
          _
        // Predicated region
        $region117: #{tpu_custom_call.1} parent=87 // pred_check
          %p1182 = pneg %p462
        $region118: #{tpu_custom_call.1} parent=87 // pred_check_branch
          %1184 = sbr.rel (%p1182) target = $region120
        $region119: #{tpu_custom_call.1} parent=87 // pred_region
          %1186 = vsyncadd [#allocation13], 0
          %s1187 = smul.addr %s41, 2
          %s1188 = scalar_lea.hbm %s18, %s1187
          %s1190 = sshll.u32 [#allocation12], 4
          %s1191 = int_to_ptr.vmem [resolvable:$true] %s1190
          %s1192 = sshll.u32 %s1188, 4
          %s1193 = int_to_ptr.hbm [resolvable:$true] %s1192
          %1195 = dma.vmem_to_hbm [thread:$0]  %s1191, 32, %s1193, [#allocation13]
        $region120: #{tpu_custom_call.1} parent=87 // pred_fallthru
          _
        // Predicated region
        $region121: #{tpu_custom_call.1} parent=87 // pred_check
          %p1196 = pneg %p436
        $region122: #{tpu_custom_call.1} parent=87 // pred_check_branch
          %1198 = sbr.rel (%p1196) target = $region124
        $region123: #{tpu_custom_call.1} parent=87 // pred_region
          %1200 = dma.done [#allocation5], 32
        $region124: #{tpu_custom_call.1} parent=87 // pred_fallthru
          _
        // Predicated region
        $region125: #{tpu_custom_call.1} parent=87 // pred_check
          %p1201 = pneg %p462
        $region126: #{tpu_custom_call.1} parent=87 // pred_check_branch
          %1203 = sbr.rel (%p1201) target = $region128
        $region127: #{tpu_custom_call.1} parent=87 // pred_region
          %1205 = dma.done [#allocation13], 32
        $region128: #{tpu_custom_call.1} parent=87 // pred_fallthru
          _
      $region88: #{tpu_custom_call.1} parent=5 // pred_fallthru
        _
      %p1206 = scmp.le.s32.totalorder 2, %s32
      // Predicated region
      $region129: #{tpu_custom_call.1} parent=5 // pred_check
        %p1207 = pneg %p1206
      $region130: #{tpu_custom_call.1} parent=5 // pred_check_branch
        %1209 = sbr.rel (%p1207) target = $region132
      $region131: #{tpu_custom_call.1} parent=5 // pred_region
        %s1210 = ssub.s32 %s32, 2
      $region132: #{tpu_custom_call.1} parent=5 // pred_fallthru
        _
    $region6: #{tpu_custom_call.1} parent=1 // loop_footer
      %s36 = sadd.s32 1, %s32
    $region7: #{tpu_custom_call.1} parent=1 // loop_footer_branch
      %31 = sbr.rel target = $region3
    $region8: #{tpu_custom_call.1} parent=1 // loop_exit
      _
    %1211 = vsyncpa [#allocation4], 1
    %s1212 = scalar_lea.sflag [#allocation4], 1
    %1213 = vsyncpa %s1212, 1
    %1214 = vsyncpa [#allocation7], 1
    %1215 = vsyncpa [#allocation10], 1
    %1216 = vsyncpa [#allocation5], 1
    %s1217 = scalar_lea.sflag [#allocation5], 1
    %1218 = vsyncpa %s1217, 1
    %1219 = vsyncpa [#allocation13], 1

</llo_original>
